<compile_context>
chip_gen: v7x
topology: tpu7x:2x2x1
jax: 0.10.0
libtpu: 0.0.40
codegen_flags: <defaults>
</compile_context>

<pallas_src>
import functools
import math

import jax
import jax.numpy as jnp
from jax.experimental import pallas as pl
from jax.experimental.pallas import tpu as pltpu


def attention_kernel(x_ref, wqkv_ref, bqkv_ref, wo_ref, bo_ref, out_ref,
                     *opt_attn_ref, batch, seq, hidden, num_heads, head_size):
    """Whole problem in one grid step.

    x_ref    : (B*S, H)          VMEM
    wqkv_ref : (H, 3H)           VMEM  packed [Wq*scale | Wk | Wv], (in, out) layout
    bqkv_ref : (1, 3H)           VMEM  packed [bq*scale | bk | bv]
    wo_ref   : (H, H)            VMEM
    bo_ref   : (1, H)            VMEM
    out_ref  : (B*S, H)          VMEM
    attn_ref : (B, nh, S, S)     VMEM  (optional, softmax probabilities)
    """
    attn_ref = opt_attn_ref[0] if opt_attn_ref else None

    x = x_ref[...]                                                # (B*S, H) f32

    # Fused Q/K/V projection: one MXU matmul, f32 accumulation.  The
    # 1/sqrt(head_size) scale is already folded into the Q columns.
    qkv = (jnp.dot(x, wqkv_ref[...], preferred_element_type=jnp.float32)
           + bqkv_ref[...])                                       # (B*S, 3H)

    ctx_heads = []
    for h in range(num_heads):                                    # static, tiny head count
        q0 = h * head_size
        k0 = hidden + h * head_size
        v0 = 2 * hidden + h * head_size

        # (B*S, hd) -> (B, S, hd): split of the leading (sublane) dim only.
        qh = qkv[:, q0:q0 + head_size].reshape(batch, seq, head_size)
        kh = qkv[:, k0:k0 + head_size].reshape(batch, seq, head_size)
        vh = qkv[:, v0:v0 + head_size].reshape(batch, seq, head_size)

        # attention_scores = (q * scale) @ k^T, batched over B.
        s = jnp.einsum("bqd,bkd->bqk", qh, kh,
                       preferred_element_type=jnp.float32)        # (B, S, S)

        # softmax over the last dim (f32, max-subtracted, precomputed reciprocal)
        m = jnp.max(s, axis=-1, keepdims=True)
        e = jnp.exp(s - m)
        denom = jnp.sum(e, axis=-1, keepdims=True)
        p = e * pl.reciprocal(denom)                              # (B, S, S)

        if attn_ref is not None:
            # Direct store into the (B, nh, S, S) layout — no wrapper transpose.
            attn_ref[:, h] = p.astype(attn_ref.dtype)

        # context_h = probs @ v  (batched over B)
        ctx_h = jnp.einsum("bqk,bkd->bqd", p, vh,
                           preferred_element_type=jnp.float32)    # (B, S, hd)
        ctx_heads.append(ctx_h.reshape(batch * seq, head_size))

    # Single output projection: one MXU matmul on the reassembled context.
    ctx = jnp.concatenate(ctx_heads, axis=-1)                     # (B*S, H)
    out = (jnp.dot(ctx, wo_ref[...], preferred_element_type=jnp.float32)
           + bo_ref[...])
    out_ref[...] = out.astype(out_ref.dtype)


def pack_params(params, *, num_heads):
    """One-time packing (do this at param-init/load time, NOT per forward call).

    Folds the 1/sqrt(head_size) attention scale into the Q weight/bias columns.
    """
    hidden = params["wq"].shape[0]
    head_size = hidden // num_heads
    scale = 1.0 / math.sqrt(head_size)
    wqkv = jnp.concatenate(
        [params["wq"] * scale, params["wk"], params["wv"]], axis=1)   # (H, 3H)
    bqkv = jnp.concatenate(
        [params["bq"] * scale, params["bk"], params["bv"]], axis=1)   # (1, 3H)
    return {
        "wqkv": wqkv, "bqkv": bqkv,
        "wo": params["wo"], "bo": params["bo"],
        "num_heads": num_heads, "hidden": hidden, "head_size": head_size,
    }


def attention_forward(hidden_states, packed, *, vis=False):
    """hidden_states: (B, S, H); packed: output of pack_params.

    Returns (attention_output (B, S, H), weights (B, nh, S, S) or None).
    """
    B, S, H = hidden_states.shape
    num_heads = packed["num_heads"]
    head_size = packed["head_size"]

    x2d = hidden_states.reshape(B * S, H)

    kernel = functools.partial(attention_kernel,
                               batch=B, seq=S, hidden=H,
                               num_heads=num_heads, head_size=head_size)

    out_shapes = [jax.ShapeDtypeStruct((B * S, H), hidden_states.dtype)]
    out_specs = [pl.BlockSpec((B * S, H), lambda i: (0, 0))]
    if vis:
        out_shapes.append(
            jax.ShapeDtypeStruct((B, num_heads, S, S), jnp.float32))
        out_specs.append(
            pl.BlockSpec((B, num_heads, S, S), lambda i: (0, 0, 0, 0)))

    results = pl.pallas_call(
        kernel,
        out_shape=tuple(out_shapes),
        grid=(1,),                                   # single step: no per-step pipeline cost
        in_specs=[
            pl.BlockSpec((B * S, H), lambda i: (0, 0)),     # hidden_states (flattened)
            pl.BlockSpec((H, 3 * H), lambda i: (0, 0)),     # packed Wqkv (scale folded)
            pl.BlockSpec((1, 3 * H), lambda i: (0, 0)),     # packed bqkv
            pl.BlockSpec((H, H), lambda i: (0, 0)),         # Wo
            pl.BlockSpec((1, H), lambda i: (0, 0)),         # bo
        ],
        out_specs=tuple(out_specs),
        compiler_params=pltpu.CompilerParams(
            dimension_semantics=("arbitrary",)),
    )(x2d, packed["wqkv"], packed["bqkv"], packed["wo"], packed["bo"])

    if vis:
        out2d, weights = results                       # weights already (B, nh, S, S)
    else:
        (out2d,) = results
        weights = None

    return out2d.reshape(B, S, H), weights


def init_params(key, hidden_size):
    """Deterministic synthetic parameters (Linear weights stored as (in, out))."""
    keys = jax.random.split(key, 8)
    scale = 1.0 / math.sqrt(hidden_size)

    def w(k):
        return jax.random.normal(k, (hidden_size, hidden_size), jnp.float32) * scale

    def b(k):
        return jax.random.normal(k, (1, hidden_size), jnp.float32) * 0.01

    return {
        "wq": w(keys[0]), "bq": b(keys[1]),
        "wk": w(keys[2]), "bk": b(keys[3]),
        "wv": w(keys[4]), "bv": b(keys[5]),
        "wo": w(keys[6]), "bo": b(keys[7]),
    }


def reference_attention(x, params, *, num_heads):
    """Pure-JAX reference mirroring the PyTorch forward (eval mode)."""
    B, S, H = x.shape
    hd = H // num_heads
    q = x @ params["wq"] + params["bq"]
    k = x @ params["wk"] + params["bk"]
    v = x @ params["wv"] + params["bv"]

    def split(t):
        return t.reshape(B, S, num_heads, hd).transpose(0, 2, 1, 3)

    qh, kh, vh = split(q), split(k), split(v)
    scores = jnp.einsum("bhqd,bhkd->bhqk", qh, kh) / math.sqrt(hd)
    probs = jax.nn.softmax(scores, axis=-1)
    ctx = jnp.einsum("bhqk,bhkd->bhqd", probs, vh)
    ctx = ctx.transpose(0, 2, 1, 3).reshape(B, S, H)
    out = ctx @ params["wo"] + params["bo"]
    return out, probs


if __name__ == "__main__":
    # Config (mirrors tf_hidden_size / tf_num_heads): hidden=32, heads=4 -> head_size=8.
    B, S, H = 2, 8, 32
    NUM_HEADS = 4

    key = jax.random.PRNGKey(0)
    k_x, k_p = jax.random.split(key)
    hidden_states = jax.random.normal(k_x, (B, S, H), jnp.float32)
    params = init_params(k_p, H)

    # One-time packing (cached outside the forward path).
    packed = pack_params(params, num_heads=NUM_HEADS)
    packed = jax.tree_util.tree_map(
        lambda t: jax.block_until_ready(t) if isinstance(t, jax.Array) else t, packed)

    # vis=True path (module with tf_vis=True).
    out, weights = attention_forward(hidden_states, packed, vis=True)
    out = jax.block_until_ready(out)
    weights = jax.block_until_ready(weights)

    # vis=False (default) path — weights is None, probs output never allocated.
    out_novis, w_none = attention_forward(hidden_states, packed)
    out_novis = jax.block_until_ready(out_novis)
    assert w_none is None

    # Sanity check against pure-JAX reference.
    ref_out, ref_w = reference_attention(hidden_states, params, num_heads=NUM_HEADS)
    assert jnp.allclose(out, ref_out, atol=1e-4, rtol=1e-4), "output mismatch"
    assert jnp.allclose(weights, ref_w, atol=1e-4, rtol=1e-4), "attn weights mismatch"
    assert jnp.allclose(out_novis, ref_out, atol=1e-4, rtol=1e-4), "vis=False output mismatch"

    print("KERNEL_OK")
</pallas_src>

<mosaic_0001>
module attributes {stable_mosaic.version = 11 : i64} {
  func.func @attention_kernel(%arg0: i32, %arg1: memref<16x32xf32, #tpu.memory_space<vmem>>, %arg2: memref<32x96xf32, #tpu.memory_space<vmem>>, %arg3: memref<1x96xf32, #tpu.memory_space<vmem>>, %arg4: memref<32x32xf32, #tpu.memory_space<vmem>>, %arg5: memref<1x32xf32, #tpu.memory_space<vmem>>, %arg6: memref<16x32xf32, #tpu.memory_space<vmem>>, %arg7: memref<2x4x8x8xf32, #tpu.memory_space<vmem>>) attributes {dimension_semantics = [#tpu.dimension_semantics<arbitrary>], iteration_bounds = array<i64: 1>, scalar_prefetch = 0 : i64, scratch_operands = 0 : i64, tpu.core_type = #tpu.core_type<tc>, window_params = [{pipeline_mode = #tpu.pipeline_mode<synchronous>, transform_indices = @transform_0, window_bounds = array<i64: 16, 32>}, {pipeline_mode = #tpu.pipeline_mode<synchronous>, transform_indices = @transform_1, window_bounds = array<i64: 32, 96>}, {pipeline_mode = #tpu.pipeline_mode<synchronous>, transform_indices = @transform_2, window_bounds = array<i64: 1, 96>}, {pipeline_mode = #tpu.pipeline_mode<synchronous>, transform_indices = @transform_3, window_bounds = array<i64: 32, 32>}, {pipeline_mode = #tpu.pipeline_mode<synchronous>, transform_indices = @transform_4, window_bounds = array<i64: 1, 32>}, {pipeline_mode = #tpu.pipeline_mode<synchronous>, transform_indices = @transform_5, window_bounds = array<i64: 16, 32>}, {pipeline_mode = #tpu.pipeline_mode<synchronous>, transform_indices = @transform_6, window_bounds = array<i64: 2, 4, 8, 8>}]} {
    %c0 = arith.constant 0 : index
    %c0_0 = arith.constant 0 : index
    %0 = vector.load %arg1[%c0, %c0_0] : memref<16x32xf32, #tpu.memory_space<vmem>>, vector<16x32xf32>
    %c0_1 = arith.constant 0 : index
    %c0_2 = arith.constant 0 : index
    %1 = vector.load %arg2[%c0_1, %c0_2] : memref<32x96xf32, #tpu.memory_space<vmem>>, vector<32x96xf32>
    %cst = arith.constant dense<0.000000e+00> : vector<16x96xf32>
    %2 = tpu.matmul %0, %1, %cst {dimension_numbers = #tpu.dot_dimension_numbers<[1], [0], [0], [1], [0, 0, 1, 1], [], []>} : vector<16x32xf32>, vector<32x96xf32>, vector<16x96xf32> -> vector<16x96xf32>
    %c0_3 = arith.constant 0 : index
    %c0_4 = arith.constant 0 : index
    %3 = vector.load %arg3[%c0_3, %c0_4] : memref<1x96xf32, #tpu.memory_space<vmem>>, vector<1x96xf32>
    %4 = vector.broadcast %3 : vector<1x96xf32> to vector<16x96xf32>
    %5 = arith.addf %2, %4 : vector<16x96xf32>
    %6 = vector.extract_strided_slice %5 {offsets = [0, 0], sizes = [16, 8], strides = [1, 1]} : vector<16x96xf32> to vector<16x8xf32>
    %7 = vector.shape_cast %6 : vector<16x8xf32> to vector<2x8x8xf32>
    %8 = vector.extract_strided_slice %5 {offsets = [0, 32], sizes = [16, 8], strides = [1, 1]} : vector<16x96xf32> to vector<16x8xf32>
    %9 = vector.shape_cast %8 : vector<16x8xf32> to vector<2x8x8xf32>
    %10 = vector.extract_strided_slice %5 {offsets = [0, 64], sizes = [16, 8], strides = [1, 1]} : vector<16x96xf32> to vector<16x8xf32>
    %11 = vector.shape_cast %10 : vector<16x8xf32> to vector<2x8x8xf32>
    "tpu.trace_start"() <{level = 10 : i32, message = "bqd,bkd->bqk"}> : () -> ()
    %cst_5 = arith.constant dense<0.000000e+00> : vector<2x8x8xf32>
    %12 = tpu.matmul %7, %9, %cst_5 {dimension_numbers = #tpu.dot_dimension_numbers<[2], [2], [1], [1], [0, 0, 0, 1, 1, 1], [0], [0]>} : vector<2x8x8xf32>, vector<2x8x8xf32>, vector<2x8x8xf32> -> vector<2x8x8xf32>
    "tpu.trace_stop"() : () -> ()
    %cst_6 = arith.constant dense<0xFF800000> : vector<2x8xf32>
    %13 = vector.multi_reduction <maximumf>, %12, %cst_6 [2] : vector<2x8x8xf32> to vector<2x8xf32>
    %14 = vector.shape_cast %13 : vector<2x8xf32> to vector<2x8x1xf32>
    %15 = vector.broadcast %14 : vector<2x8x1xf32> to vector<2x8x8xf32>
    %16 = arith.subf %12, %15 : vector<2x8x8xf32>
    %17 = math.exp %16 : vector<2x8x8xf32>
    %cst_7 = arith.constant dense<0.000000e+00> : vector<2x8xf32>
    %18 = vector.multi_reduction <add>, %17, %cst_7 [2] : vector<2x8x8xf32> to vector<2x8xf32>
    %19 = vector.shape_cast %18 : vector<2x8xf32> to vector<2x8x1xf32>
    %20 = tpu.reciprocal %19 : vector<2x8x1xf32> -> vector<2x8x1xf32>
    %21 = vector.broadcast %20 : vector<2x8x1xf32> to vector<2x8x8xf32>
    %22 = arith.mulf %17, %21 : vector<2x8x8xf32>
    %c0_8 = arith.constant 0 : index
    %c0_9 = arith.constant 0 : index
    %c0_10 = arith.constant 0 : index
    %c0_11 = arith.constant 0 : index
    %23 = vector.load %arg7[%c0_8, %c0_9, %c0_10, %c0_11] : memref<2x4x8x8xf32, #tpu.memory_space<vmem>>, vector<2x1x8x8xf32>
    %24 = vector.shape_cast %23 : vector<2x1x8x8xf32> to vector<2x8x8xf32>
    %25 = vector.shape_cast %22 : vector<2x8x8xf32> to vector<2x1x8x8xf32>
    tpu.vector_store %arg7[%c0_8, %c0_9, %c0_10, %c0_11], %25 {strides = array<i32>} : memref<2x4x8x8xf32, #tpu.memory_space<vmem>>, vector<2x1x8x8xf32>,
    "tpu.trace_start"() <{level = 10 : i32, message = "bqk,bkd->bqd"}> : () -> ()
    %cst_12 = arith.constant dense<0.000000e+00> : vector<2x8x8xf32>
    %26 = tpu.matmul %22, %11, %cst_12 {dimension_numbers = #tpu.dot_dimension_numbers<[2], [1], [1], [2], [0, 0, 0, 1, 1, 2], [0], [0]>} : vector<2x8x8xf32>, vector<2x8x8xf32>, vector<2x8x8xf32> -> vector<2x8x8xf32>
    "tpu.trace_stop"() : () -> ()
    %27 = vector.shape_cast %26 : vector<2x8x8xf32> to vector<16x8xf32>
    %28 = vector.extract_strided_slice %5 {offsets = [0, 8], sizes = [16, 8], strides = [1, 1]} : vector<16x96xf32> to vector<16x8xf32>
    %29 = vector.shape_cast %28 : vector<16x8xf32> to vector<2x8x8xf32>
    %30 = vector.extract_strided_slice %5 {offsets = [0, 40], sizes = [16, 8], strides = [1, 1]} : vector<16x96xf32> to vector<16x8xf32>
    %31 = vector.shape_cast %30 : vector<16x8xf32> to vector<2x8x8xf32>
    %32 = vector.extract_strided_slice %5 {offsets = [0, 72], sizes = [16, 8], strides = [1, 1]} : vector<16x96xf32> to vector<16x8xf32>
    %33 = vector.shape_cast %32 : vector<16x8xf32> to vector<2x8x8xf32>
    "tpu.trace_start"() <{level = 10 : i32, message = "bqd,bkd->bqk"}> : () -> ()
    %cst_13 = arith.constant dense<0.000000e+00> : vector<2x8x8xf32>
    %34 = tpu.matmul %29, %31, %cst_13 {dimension_numbers = #tpu.dot_dimension_numbers<[2], [2], [1], [1], [0, 0, 0, 1, 1, 1], [0], [0]>} : vector<2x8x8xf32>, vector<2x8x8xf32>, vector<2x8x8xf32> -> vector<2x8x8xf32>
    "tpu.trace_stop"() : () -> ()
    %cst_14 = arith.constant dense<0xFF800000> : vector<2x8xf32>
    %35 = vector.multi_reduction <maximumf>, %34, %cst_14 [2] : vector<2x8x8xf32> to vector<2x8xf32>
    %36 = vector.shape_cast %35 : vector<2x8xf32> to vector<2x8x1xf32>
    %37 = vector.broadcast %36 : vector<2x8x1xf32> to vector<2x8x8xf32>
    %38 = arith.subf %34, %37 : vector<2x8x8xf32>
    %39 = math.exp %38 : vector<2x8x8xf32>
    %cst_15 = arith.constant dense<0.000000e+00> : vector<2x8xf32>
    %40 = vector.multi_reduction <add>, %39, %cst_15 [2] : vector<2x8x8xf32> to vector<2x8xf32>
    %41 = vector.shape_cast %40 : vector<2x8xf32> to vector<2x8x1xf32>
    %42 = tpu.reciprocal %41 : vector<2x8x1xf32> -> vector<2x8x1xf32>
    %43 = vector.broadcast %42 : vector<2x8x1xf32> to vector<2x8x8xf32>
    %44 = arith.mulf %39, %43 : vector<2x8x8xf32>
    %c0_16 = arith.constant 0 : index
    %c1 = arith.constant 1 : index
    %c0_17 = arith.constant 0 : index
    %c0_18 = arith.constant 0 : index
    %45 = vector.load %arg7[%c0_16, %c1, %c0_17, %c0_18] : memref<2x4x8x8xf32, #tpu.memory_space<vmem>>, vector<2x1x8x8xf32>
    %46 = vector.shape_cast %45 : vector<2x1x8x8xf32> to vector<2x8x8xf32>
    %47 = vector.shape_cast %44 : vector<2x8x8xf32> to vector<2x1x8x8xf32>
    tpu.vector_store %arg7[%c0_16, %c1, %c0_17, %c0_18], %47 {strides = array<i32>} : memref<2x4x8x8xf32, #tpu.memory_space<vmem>>, vector<2x1x8x8xf32>,
    "tpu.trace_start"() <{level = 10 : i32, message = "bqk,bkd->bqd"}> : () -> ()
    %cst_19 = arith.constant dense<0.000000e+00> : vector<2x8x8xf32>
    %48 = tpu.matmul %44, %33, %cst_19 {dimension_numbers = #tpu.dot_dimension_numbers<[2], [1], [1], [2], [0, 0, 0, 1, 1, 2], [0], [0]>} : vector<2x8x8xf32>, vector<2x8x8xf32>, vector<2x8x8xf32> -> vector<2x8x8xf32>
    "tpu.trace_stop"() : () -> ()
    %49 = vector.shape_cast %48 : vector<2x8x8xf32> to vector<16x8xf32>
    %50 = vector.extract_strided_slice %5 {offsets = [0, 16], sizes = [16, 8], strides = [1, 1]} : vector<16x96xf32> to vector<16x8xf32>
    %51 = vector.shape_cast %50 : vector<16x8xf32> to vector<2x8x8xf32>
    %52 = vector.extract_strided_slice %5 {offsets = [0, 48], sizes = [16, 8], strides = [1, 1]} : vector<16x96xf32> to vector<16x8xf32>
    %53 = vector.shape_cast %52 : vector<16x8xf32> to vector<2x8x8xf32>
    %54 = vector.extract_strided_slice %5 {offsets = [0, 80], sizes = [16, 8], strides = [1, 1]} : vector<16x96xf32> to vector<16x8xf32>
    %55 = vector.shape_cast %54 : vector<16x8xf32> to vector<2x8x8xf32>
    "tpu.trace_start"() <{level = 10 : i32, message = "bqd,bkd->bqk"}> : () -> ()
    %cst_20 = arith.constant dense<0.000000e+00> : vector<2x8x8xf32>
    %56 = tpu.matmul %51, %53, %cst_20 {dimension_numbers = #tpu.dot_dimension_numbers<[2], [2], [1], [1], [0, 0, 0, 1, 1, 1], [0], [0]>} : vector<2x8x8xf32>, vector<2x8x8xf32>, vector<2x8x8xf32> -> vector<2x8x8xf32>
    "tpu.trace_stop"() : () -> ()
    %cst_21 = arith.constant dense<0xFF800000> : vector<2x8xf32>
    %57 = vector.multi_reduction <maximumf>, %56, %cst_21 [2] : vector<2x8x8xf32> to vector<2x8xf32>
    %58 = vector.shape_cast %57 : vector<2x8xf32> to vector<2x8x1xf32>
    %59 = vector.broadcast %58 : vector<2x8x1xf32> to vector<2x8x8xf32>
    %60 = arith.subf %56, %59 : vector<2x8x8xf32>
    %61 = math.exp %60 : vector<2x8x8xf32>
    %cst_22 = arith.constant dense<0.000000e+00> : vector<2x8xf32>
    %62 = vector.multi_reduction <add>, %61, %cst_22 [2] : vector<2x8x8xf32> to vector<2x8xf32>
    %63 = vector.shape_cast %62 : vector<2x8xf32> to vector<2x8x1xf32>
    %64 = tpu.reciprocal %63 : vector<2x8x1xf32> -> vector<2x8x1xf32>
    %65 = vector.broadcast %64 : vector<2x8x1xf32> to vector<2x8x8xf32>
    %66 = arith.mulf %61, %65 : vector<2x8x8xf32>
    %c0_23 = arith.constant 0 : index
    %c2 = arith.constant 2 : index
    %c0_24 = arith.constant 0 : index
    %c0_25 = arith.constant 0 : index
    %67 = vector.load %arg7[%c0_23, %c2, %c0_24, %c0_25] : memref<2x4x8x8xf32, #tpu.memory_space<vmem>>, vector<2x1x8x8xf32>
    %68 = vector.shape_cast %67 : vector<2x1x8x8xf32> to vector<2x8x8xf32>
    %69 = vector.shape_cast %66 : vector<2x8x8xf32> to vector<2x1x8x8xf32>
    tpu.vector_store %arg7[%c0_23, %c2, %c0_24, %c0_25], %69 {strides = array<i32>} : memref<2x4x8x8xf32, #tpu.memory_space<vmem>>, vector<2x1x8x8xf32>,
    "tpu.trace_start"() <{level = 10 : i32, message = "bqk,bkd->bqd"}> : () -> ()
    %cst_26 = arith.constant dense<0.000000e+00> : vector<2x8x8xf32>
    %70 = tpu.matmul %66, %55, %cst_26 {dimension_numbers = #tpu.dot_dimension_numbers<[2], [1], [1], [2], [0, 0, 0, 1, 1, 2], [0], [0]>} : vector<2x8x8xf32>, vector<2x8x8xf32>, vector<2x8x8xf32> -> vector<2x8x8xf32>
    "tpu.trace_stop"() : () -> ()
    %71 = vector.shape_cast %70 : vector<2x8x8xf32> to vector<16x8xf32>
    %72 = vector.extract_strided_slice %5 {offsets = [0, 24], sizes = [16, 8], strides = [1, 1]} : vector<16x96xf32> to vector<16x8xf32>
    %73 = vector.shape_cast %72 : vector<16x8xf32> to vector<2x8x8xf32>
    %74 = vector.extract_strided_slice %5 {offsets = [0, 56], sizes = [16, 8], strides = [1, 1]} : vector<16x96xf32> to vector<16x8xf32>
    %75 = vector.shape_cast %74 : vector<16x8xf32> to vector<2x8x8xf32>
    %76 = vector.extract_strided_slice %5 {offsets = [0, 88], sizes = [16, 8], strides = [1, 1]} : vector<16x96xf32> to vector<16x8xf32>
    %77 = vector.shape_cast %76 : vector<16x8xf32> to vector<2x8x8xf32>
    "tpu.trace_start"() <{level = 10 : i32, message = "bqd,bkd->bqk"}> : () -> ()
    %cst_27 = arith.constant dense<0.000000e+00> : vector<2x8x8xf32>
    %78 = tpu.matmul %73, %75, %cst_27 {dimension_numbers = #tpu.dot_dimension_numbers<[2], [2], [1], [1], [0, 0, 0, 1, 1, 1], [0], [0]>} : vector<2x8x8xf32>, vector<2x8x8xf32>, vector<2x8x8xf32> -> vector<2x8x8xf32>
    "tpu.trace_stop"() : () -> ()
    %cst_28 = arith.constant dense<0xFF800000> : vector<2x8xf32>
    %79 = vector.multi_reduction <maximumf>, %78, %cst_28 [2] : vector<2x8x8xf32> to vector<2x8xf32>
    %80 = vector.shape_cast %79 : vector<2x8xf32> to vector<2x8x1xf32>
    %81 = vector.broadcast %80 : vector<2x8x1xf32> to vector<2x8x8xf32>
    %82 = arith.subf %78, %81 : vector<2x8x8xf32>
    %83 = math.exp %82 : vector<2x8x8xf32>
    %cst_29 = arith.constant dense<0.000000e+00> : vector<2x8xf32>
    %84 = vector.multi_reduction <add>, %83, %cst_29 [2] : vector<2x8x8xf32> to vector<2x8xf32>
    %85 = vector.shape_cast %84 : vector<2x8xf32> to vector<2x8x1xf32>
    %86 = tpu.reciprocal %85 : vector<2x8x1xf32> -> vector<2x8x1xf32>
    %87 = vector.broadcast %86 : vector<2x8x1xf32> to vector<2x8x8xf32>
    %88 = arith.mulf %83, %87 : vector<2x8x8xf32>
    %c0_30 = arith.constant 0 : index
    %c3 = arith.constant 3 : index
    %c0_31 = arith.constant 0 : index
    %c0_32 = arith.constant 0 : index
    %89 = vector.load %arg7[%c0_30, %c3, %c0_31, %c0_32] : memref<2x4x8x8xf32, #tpu.memory_space<vmem>>, vector<2x1x8x8xf32>
    %90 = vector.shape_cast %89 : vector<2x1x8x8xf32> to vector<2x8x8xf32>
    %91 = vector.shape_cast %88 : vector<2x8x8xf32> to vector<2x1x8x8xf32>
    tpu.vector_store %arg7[%c0_30, %c3, %c0_31, %c0_32], %91 {strides = array<i32>} : memref<2x4x8x8xf32, #tpu.memory_space<vmem>>, vector<2x1x8x8xf32>,
    "tpu.trace_start"() <{level = 10 : i32, message = "bqk,bkd->bqd"}> : () -> ()
    %cst_33 = arith.constant dense<0.000000e+00> : vector<2x8x8xf32>
    %92 = tpu.matmul %88, %77, %cst_33 {dimension_numbers = #tpu.dot_dimension_numbers<[2], [1], [1], [2], [0, 0, 0, 1, 1, 2], [0], [0]>} : vector<2x8x8xf32>, vector<2x8x8xf32>, vector<2x8x8xf32> -> vector<2x8x8xf32>
    "tpu.trace_stop"() : () -> ()
    %93 = vector.shape_cast %92 : vector<2x8x8xf32> to vector<16x8xf32>
    %94 = tpu.concatenate %27, %49, %71, %93 in 1 : vector<16x8xf32>, vector<16x8xf32>, vector<16x8xf32>, vector<16x8xf32> -> vector<16x32xf32>
    %c0_34 = arith.constant 0 : index
    %c0_35 = arith.constant 0 : index
    %95 = vector.load %arg4[%c0_34, %c0_35] : memref<32x32xf32, #tpu.memory_space<vmem>>, vector<32x32xf32>
    %cst_36 = arith.constant dense<0.000000e+00> : vector<16x32xf32>
    %96 = tpu.matmul %94, %95, %cst_36 {dimension_numbers = #tpu.dot_dimension_numbers<[1], [0], [0], [1], [0, 0, 1, 1], [], []>} : vector<16x32xf32>, vector<32x32xf32>, vector<16x32xf32> -> vector<16x32xf32>
    %c0_37 = arith.constant 0 : index
    %c0_38 = arith.constant 0 : index
    %97 = vector.load %arg5[%c0_37, %c0_38] : memref<1x32xf32, #tpu.memory_space<vmem>>, vector<1x32xf32>
    %98 = vector.broadcast %97 : vector<1x32xf32> to vector<16x32xf32>
    %99 = arith.addf %96, %98 : vector<16x32xf32>
    %c0_39 = arith.constant 0 : index
    %c0_40 = arith.constant 0 : index
    %100 = vector.load %arg6[%c0_39, %c0_40] : memref<16x32xf32, #tpu.memory_space<vmem>>, vector<16x32xf32>
    tpu.vector_store %arg6[%c0_39, %c0_40], %99 {strides = array<i32>} : memref<16x32xf32, #tpu.memory_space<vmem>>, vector<16x32xf32>,
    return
  }
  func.func @transform_0(%arg0: i32) -> (i32, i32) {
    %c0_i32 = arith.constant 0 : i32
    %c0_i32_0 = arith.constant 0 : i32
    %c0_i32_1 = arith.constant 0 : i32
    return %c0_i32, %c0_i32_0 : i32, i32
  }
  func.func @transform_1(%arg0: i32) -> (i32, i32) {
    %c0_i32 = arith.constant 0 : i32
    %c0_i32_0 = arith.constant 0 : i32
    %c0_i32_1 = arith.constant 0 : i32
    return %c0_i32, %c0_i32_0 : i32, i32
  }
  func.func @transform_2(%arg0: i32) -> (i32, i32) {
    %c0_i32 = arith.constant 0 : i32
    %c0_i32_0 = arith.constant 0 : i32
    %c0_i32_1 = arith.constant 0 : i32
    return %c0_i32, %c0_i32_0 : i32, i32
  }
  func.func @transform_3(%arg0: i32) -> (i32, i32) {
    %c0_i32 = arith.constant 0 : i32
    %c0_i32_0 = arith.constant 0 : i32
    %c0_i32_1 = arith.constant 0 : i32
    return %c0_i32, %c0_i32_0 : i32, i32
  }
  func.func @transform_4(%arg0: i32) -> (i32, i32) {
    %c0_i32 = arith.constant 0 : i32
    %c0_i32_0 = arith.constant 0 : i32
    %c0_i32_1 = arith.constant 0 : i32
    return %c0_i32, %c0_i32_0 : i32, i32
  }
  func.func @transform_5(%arg0: i32) -> (i32, i32) {
    %c0_i32 = arith.constant 0 : i32
    %c0_i32_0 = arith.constant 0 : i32
    %c0_i32_1 = arith.constant 0 : i32
    return %c0_i32, %c0_i32_0 : i32, i32
  }
  func.func @transform_6(%arg0: i32) -> (i32, i32, i32, i32) {
    %c0_i32 = arith.constant 0 : i32
    %c0_i32_0 = arith.constant 0 : i32
    %c0_i32_1 = arith.constant 0 : i32
    %c0_i32_2 = arith.constant 0 : i32
    %c0_i32_3 = arith.constant 0 : i32
    return %c0_i32, %c0_i32_0, %c0_i32_1, %c0_i32_2 : i32, i32, i32, i32
  }
}

</mosaic_0001>

<llo_original>
// kernel: tpu_custom_call.1
$region0: #{tpu_custom_call.1}
  #allocation0 [shape = 'u32[]', space=smem, size = 0x4, offset = 0x4, fixed_abs, tag = 'smem constant byte address 0x4 - core index']
  #allocation1 [shape = 'u32[144,128]{1,0:T(1,128)}', space=vmem, size = 0x12000, scoped, tag = 'internal scratch']
  %s0 = inlined_call_operand.hbm [shape: f32[16,32], index: 0, kind: input, shape index: {}]
  %s1 = inlined_call_operand.hbm [shape: f32[32,96], index: 1, kind: input, shape index: {}]
  %s2 = inlined_call_operand.vmem [shape: f32[1,96], index: 2, kind: input, shape index: {}]
  %s3 = inlined_call_operand.hbm [shape: f32[32,32], index: 3, kind: input, shape index: {}]
  %s4 = inlined_call_operand.vmem [shape: f32[1,32], index: 4, kind: input, shape index: {}]
  %s5 = inlined_call_operand.hbm [shape: f32[16,32], index: 5, kind: output, shape index: {0}]
  %s6 = inlined_call_operand.hbm [shape: f32[2,4,8,8], index: 6, kind: output, shape index: {1}]
  %7 = xla_tuple %s5, %s6
  %s8 = sld [smem:[#allocation0]]
  $region50: #{tpu_custom_call.1} parent=0
    _
  %s10 = ssub.s32 1, %s8
  %s11 = scalar_select 0, %s10, %s8
  $region1: #{tpu_custom_call.1} parent=0
    #allocation2 [shape = 'u8[8192]{0}', space=vmem, size = 0x2000, scoped, tag = 'input window, operand 0, single buffered']
    #allocation3 [shape = 's32[1]{0}', space=sflag, size = 0x4, scoped, tag = 'scoped memory for tpu_custom_call.1']
    #allocation4 [shape = 's32[1]{0}', space=sflag, size = 0x4, scoped, tag = 'scoped memory for tpu_custom_call.1']
    #allocation5 [shape = 'u8[16384]{0}', space=vmem, size = 0x4000, scoped, tag = 'input window, operand 1, single buffered']
    #allocation6 [shape = 's32[1]{0}', space=sflag, size = 0x4, scoped, tag = 'scoped memory for tpu_custom_call.1']
    #allocation7 [shape = 'u8[16384]{0}', space=vmem, size = 0x4000, scoped, tag = 'input window, operand 3, single buffered']
    #allocation8 [shape = 'u8[8192]{0}', space=vmem, size = 0x2000, scoped, tag = 'output window, operand 0, single buffered']
    #allocation9 [shape = 'u8[32768]{0}', space=vmem, size = 0x8000, scoped, tag = 'output window, operand 1, single buffered']
    #allocation10 [shape = 's32[1]{0}', space=sflag, size = 0x4, scoped, tag = 'scoped memory for tpu_custom_call.1']
    %12 = vsyncpa [#allocation3], 0
    %13 = vsyncpa [#allocation6], 0
    %14 = vsyncpa [#allocation4], 0
    %15 = vsyncpa [#allocation10], 0
    // Predicated region
    $region2: #{tpu_custom_call.1} parent=1 // pred_check
      _
    $region3: #{tpu_custom_call.1} parent=1 // pred_check_branch
      %17 = sbr.rel (0) target = $region5
    $region4: #{tpu_custom_call.1} parent=1 // pred_region
      %s19 = ssub.s32 256, 256
      %20 = vsyncadd [#allocation3], %s19
      %s21 = sshll.u32 [#allocation2], 4
      %s22 = int_to_ptr.vmem [resolvable:$true] %s21
      %27 = dma.hbm_to_vmem [thread:$0]  %s0, 256, %s22, [#allocation3], 128, 128, 8
    $region5: #{tpu_custom_call.1} parent=1 // pred_fallthru
      _
    // Predicated region
    $region6: #{tpu_custom_call.1} parent=1 // pred_check
      _
    $region7: #{tpu_custom_call.1} parent=1 // pred_check_branch
      %29 = sbr.rel (0) target = $region9
    $region8: #{tpu_custom_call.1} parent=1 // pred_region
      %s31 = ssub.s32 512, 512
      %32 = vsyncadd [#allocation6], %s31
      %s33 = sshll.u32 [#allocation5], 4
      %s34 = int_to_ptr.vmem [resolvable:$true] %s33
      %39 = dma.hbm_to_vmem [thread:$0]  %s1, 512, %s34, [#allocation6], 128, 128, 8
    $region9: #{tpu_custom_call.1} parent=1 // pred_fallthru
      _
    // Predicated region
    $region10: #{tpu_custom_call.1} parent=1 // pred_check
      _
    $region11: #{tpu_custom_call.1} parent=1 // pred_check_branch
      %41 = sbr.rel (0) target = $region13
    $region12: #{tpu_custom_call.1} parent=1 // pred_region
      _
    $region13: #{tpu_custom_call.1} parent=1 // pred_fallthru
      _
    // Predicated region
    $region14: #{tpu_custom_call.1} parent=1 // pred_check
      _
    $region15: #{tpu_custom_call.1} parent=1 // pred_check_branch
      %43 = sbr.rel (0) target = $region17
    $region16: #{tpu_custom_call.1} parent=1 // pred_region
      %s45 = ssub.s32 512, 512
      %46 = vsyncadd [#allocation6], %s45
      %s47 = sshll.u32 [#allocation7], 4
      %s48 = int_to_ptr.vmem [resolvable:$true] %s47
      %53 = dma.hbm_to_vmem [thread:$0]  %s3, 512, %s48, [#allocation6], 128, 128, 8
    $region17: #{tpu_custom_call.1} parent=1 // pred_fallthru
      _
    // Predicated region
    $region18: #{tpu_custom_call.1} parent=1 // pred_check
      _
    $region19: #{tpu_custom_call.1} parent=1 // pred_check_branch
      %55 = sbr.rel (0) target = $region21
    $region20: #{tpu_custom_call.1} parent=1 // pred_region
      _
    $region21: #{tpu_custom_call.1} parent=1 // pred_fallthru
      _
    // Predicated region
    $region22: #{tpu_custom_call.1} parent=1 // pred_check
      _
    $region23: #{tpu_custom_call.1} parent=1 // pred_check_branch
      %57 = sbr.rel (0) target = $region25
    $region24: #{tpu_custom_call.1} parent=1 // pred_region
      %58 = dma.done [#allocation3], 256
    $region25: #{tpu_custom_call.1} parent=1 // pred_fallthru
      _
    // Predicated region
    $region26: #{tpu_custom_call.1} parent=1 // pred_check
      _
    $region27: #{tpu_custom_call.1} parent=1 // pred_check_branch
      %60 = sbr.rel (0) target = $region29
    $region28: #{tpu_custom_call.1} parent=1 // pred_region
      %61 = dma.done [#allocation6], 512
    $region29: #{tpu_custom_call.1} parent=1 // pred_fallthru
      _
    // Predicated region
    $region30: #{tpu_custom_call.1} parent=1 // pred_check
      _
    $region31: #{tpu_custom_call.1} parent=1 // pred_check_branch
      %63 = sbr.rel (0) target = $region33
    $region32: #{tpu_custom_call.1} parent=1 // pred_region
      %64 = dma.done [#allocation6], 512
    $region33: #{tpu_custom_call.1} parent=1 // pred_fallthru
      _
    %v65 = vld [vmem:[#allocation2] sm:$0xff]
    %v66 = vld [vmem:[#allocation2 + $0x8] sm:$0xff]
    %v67 = vld [vmem:[#allocation5] sm:$0xff]
    %v68 = vld [vmem:[#allocation5 + $0x8] sm:$0xff]
    %v69 = vld [vmem:[#allocation5 + $0x10] sm:$0xff]
    %v70 = vld [vmem:[#allocation5 + $0x18] sm:$0xff]
    %v71 = vld [vmem:[%s2] sm:$0x1]
    %v73 = vlaneseq
    %v74 = vshrl.u32 %v73, 7
    %v75 = vsub.s32 0, %v74
    %v76 = vrot.slane %v71, %v75
    %vm78 = vcmask 261120
    %v80 = vsel %vm78, %v65, 0
    %v83 = vsel %vm78, %v66, 0
    %85 = vmatprep.subr.mxu0 0.0
    %86 = vmatpush1.msra.mxu0 %v67
    %87 = vmatprep.subr.mxu0 0.0
    %88 = vmatpush1.msra.mxu0 %v68
    %89 = vmatprep.subr.mxu0 0.0
    %90 = vmatpush1.msra.mxu0 %v69
    %91 = vmatprep.subr.mxu0 0.0
    %92 = vmatpush1.msra.mxu0 %v70
    %93 = vmatprep.subr.mxu0 0.0
    %94 = vmatpush1.msra.mxu0 0.0
    %95 = vmatprep.subr.mxu0 0.0
    %96 = vmatpush1.msra.mxu0 0.0
    %97 = vmatprep.subr.mxu0 0.0
    %98 = vmatpush1.msra.mxu0 0.0
    %99 = vmatprep.subr.mxu0 0.0
    %100 = vmatpush1.msra.mxu0 0.0
    %101 = vmatprep.subr.mxu0 0.0
    %102 = vmatpush1.msra.mxu0 0.0
    %103 = vmatprep.subr.mxu0 0.0
    %104 = vmatpush1.msra.mxu0 0.0
    %105 = vmatprep.subr.mxu0 0.0
    %106 = vmatpush1.msra.mxu0 0.0
    %107 = vmatprep.subr.mxu0 0.0
    %108 = vmatpush1.msra.mxu0 0.0
    %109 = vmatprep.subr.mxu0 0.0
    %110 = vmatpush1.msra.mxu0 0.0
    %111 = vmatprep.subr.mxu0 0.0
    %112 = vmatpush1.msra.mxu0 0.0
    %113 = vmatprep.subr.mxu0 0.0
    %114 = vmatpush1.msra.mxu0 0.0
    %115 = vmatprep.subr.mxu0 0.0
    %116 = vmatpush1.msra.mxu0 0.0
    %117 = vmatprep.subr.mxu0 0.0
    %118 = vmatpush1.msra.mxu0 0.0
    %119 = vmatprep.subr.mxu0 0.0
    %120 = vmatpush1.msra.mxu0 0.0
    %121 = vmatprep.subr.mxu0 0.0
    %122 = vmatpush1.msra.mxu0 0.0
    %123 = vmatprep.subr.mxu0 0.0
    %124 = vmatpush1.msra.mxu0 0.0
    %125 = vmatprep.subr.mxu0 0.0
    %126 = vmatpush1.msra.mxu0 0.0
    %127 = vmatprep.subr.mxu0 0.0
    %128 = vmatpush1.msra.mxu0 0.0
    %129 = vmatprep.subr.mxu0 0.0
    %130 = vmatpush1.msra.mxu0 0.0
    %131 = vmatprep.subr.mxu0 0.0
    %132 = vmatpush1.msra.mxu0 0.0
    %133 = vmatprep.subr.mxu0 0.0
    %134 = vmatpush1.msra.mxu0 0.0
    %135 = vmatprep.subr.mxu0 0.0
    %136 = vmatpush1.msra.mxu0 0.0
    %137 = vmatprep.subr.mxu0 0.0
    %138 = vmatpush1.msra.mxu0 0.0
    %139 = vmatprep.subr.mxu0 0.0
    %140 = vmatpush1.msra.mxu0 0.0
    %141 = vmatprep.subr.mxu0 0.0
    %142 = vmatpush1.msra.mxu0 0.0
    %143 = vmatprep.subr.mxu0 0.0
    %144 = vmatpush1.msra.mxu0 0.0
    %145 = vmatprep.subr.mxu0 0.0
    %146 = vmatpush1.msra.mxu0 0.0
    %147 = vmatprep.subr.mxu0 0.0
    %148 = vmatpush1.msra.mxu0 0.0
    %149 = vmatprep.mubr.f32.mxu0 0.0
    %150 = vmatmul.mubr.f32.gmra.mrb[0].mxu0 %v80
    %v151 = vpop.f32.mrb[0].mxu0
    %v152 = vadd.f32 %v76, %v151
    %v153 = vpop.f32.mrb[0].mxu0
    %154 = vmatprep.mubr.f32.mxu0 0.0
    %155 = vmatmul.mubr.f32.gmra.mrb[0].mxu0 %v83
    %v156 = vpop.f32.mrb[0].mxu0
    %v157 = vadd.f32 %v76, %v156
    %v158 = vpop.f32.mrb[0].mxu0
    %159 = vdwg.mxu0
    %161 = vrot.lane.b32.xlu0 %v152, 96
    %v162 = vpop.permute.xlu0 %161
    %vm163 = vcmask 64512
    %v164 = vsel %vm163, %v152, 0
    %v166 = vsel %vm163, %v162, 0
    %168 = vmatprep.subr.mxu0 0.0
    %169 = vmatpush1.xpose.msra.mxu0 %v166
    %170 = vmatprep.subr.mxu0 0.0
    %171 = vmatpush1.xpose.msra.mxu0 0.0
    %172 = vmatprep.subr.mxu0 0.0
    %173 = vmatpush1.xpose.msra.mxu0 0.0
    %174 = vmatprep.subr.mxu0 0.0
    %175 = vmatpush1.xpose.msra.mxu0 0.0
    %176 = vmatprep.subr.mxu0 0.0
    %177 = vmatpush1.xpose.msra.mxu0 0.0
    %178 = vmatprep.subr.mxu0 0.0
    %179 = vmatpush1.xpose.msra.mxu0 0.0
    %180 = vmatprep.subr.mxu0 0.0
    %181 = vmatpush1.xpose.msra.mxu0 0.0
    %182 = vmatprep.subr.mxu0 0.0
    %183 = vmatpush1.xpose.msra.mxu0 0.0
    %184 = vmatprep.subr.mxu0 0.0
    %185 = vmatpush1.xpose.msra.mxu0 0.0
    %186 = vmatprep.subr.mxu0 0.0
    %187 = vmatpush1.xpose.msra.mxu0 0.0
    %188 = vmatprep.subr.mxu0 0.0
    %189 = vmatpush1.xpose.msra.mxu0 0.0
    %190 = vmatprep.subr.mxu0 0.0
    %191 = vmatpush1.xpose.msra.mxu0 0.0
    %192 = vmatprep.subr.mxu0 0.0
    %193 = vmatpush1.xpose.msra.mxu0 0.0
    %194 = vmatprep.subr.mxu0 0.0
    %195 = vmatpush1.xpose.msra.mxu0 0.0
    %196 = vmatprep.subr.mxu0 0.0
    %197 = vmatpush1.xpose.msra.mxu0 0.0
    %198 = vmatprep.subr.mxu0 0.0
    %199 = vmatpush1.xpose.msra.mxu0 0.0
    %200 = vmatprep.subr.mxu0 0.0
    %201 = vmatpush1.xpose.msra.mxu0 0.0
    %202 = vmatprep.subr.mxu0 0.0
    %203 = vmatpush1.xpose.msra.mxu0 0.0
    %204 = vmatprep.subr.mxu0 0.0
    %205 = vmatpush1.xpose.msra.mxu0 0.0
    %206 = vmatprep.subr.mxu0 0.0
    %207 = vmatpush1.xpose.msra.mxu0 0.0
    %208 = vmatprep.subr.mxu0 0.0
    %209 = vmatpush1.xpose.msra.mxu0 0.0
    %210 = vmatprep.subr.mxu0 0.0
    %211 = vmatpush1.xpose.msra.mxu0 0.0
    %212 = vmatprep.subr.mxu0 0.0
    %213 = vmatpush1.xpose.msra.mxu0 0.0
    %214 = vmatprep.subr.mxu0 0.0
    %215 = vmatpush1.xpose.msra.mxu0 0.0
    %216 = vmatprep.subr.mxu0 0.0
    %217 = vmatpush1.xpose.msra.mxu0 0.0
    %218 = vmatprep.subr.mxu0 0.0
    %219 = vmatpush1.xpose.msra.mxu0 0.0
    %220 = vmatprep.subr.mxu0 0.0
    %221 = vmatpush1.xpose.msra.mxu0 0.0
    %222 = vmatprep.subr.mxu0 0.0
    %223 = vmatpush1.xpose.msra.mxu0 0.0
    %224 = vmatprep.subr.mxu0 0.0
    %225 = vmatpush1.xpose.msra.mxu0 0.0
    %226 = vmatprep.subr.mxu0 0.0
    %227 = vmatpush1.xpose.msra.mxu0 0.0
    %228 = vmatprep.subr.mxu0 0.0
    %229 = vmatpush1.xpose.msra.mxu0 0.0
    %230 = vmatprep.subr.mxu0 0.0
    %231 = vmatpush1.xpose.msra.mxu0 0.0
    %232 = vmatprep.mubr.f32.mxu0 0.0
    %233 = vmatmul.mubr.f32.gmra.mrb[0].mxu0 %v164
    %v234 = vpop.f32.mrb[0].mxu0
    %v235 = vadd.f32 0.0, %v234
    %v236 = vpop.f32.mrb[0].mxu0
    %237 = vdwg.mxu0
    %239 = vrot.lane.b32.xlu0 %v157, 96
    %v240 = vpop.permute.xlu0 %239
    %v241 = vsel %vm163, %v157, 0
    %v243 = vsel %vm163, %v240, 0
    %245 = vmatprep.subr.mxu0 0.0
    %246 = vmatpush1.xpose.msra.mxu0 %v243
    %247 = vmatprep.subr.mxu0 0.0
    %248 = vmatpush1.xpose.msra.mxu0 0.0
    %249 = vmatprep.subr.mxu0 0.0
    %250 = vmatpush1.xpose.msra.mxu0 0.0
    %251 = vmatprep.subr.mxu0 0.0
    %252 = vmatpush1.xpose.msra.mxu0 0.0
    %253 = vmatprep.subr.mxu0 0.0
    %254 = vmatpush1.xpose.msra.mxu0 0.0
    %255 = vmatprep.subr.mxu0 0.0
    %256 = vmatpush1.xpose.msra.mxu0 0.0
    %257 = vmatprep.subr.mxu0 0.0
    %258 = vmatpush1.xpose.msra.mxu0 0.0
    %259 = vmatprep.subr.mxu0 0.0
    %260 = vmatpush1.xpose.msra.mxu0 0.0
    %261 = vmatprep.subr.mxu0 0.0
    %262 = vmatpush1.xpose.msra.mxu0 0.0
    %263 = vmatprep.subr.mxu0 0.0
    %264 = vmatpush1.xpose.msra.mxu0 0.0
    %265 = vmatprep.subr.mxu0 0.0
    %266 = vmatpush1.xpose.msra.mxu0 0.0
    %267 = vmatprep.subr.mxu0 0.0
    %268 = vmatpush1.xpose.msra.mxu0 0.0
    %269 = vmatprep.subr.mxu0 0.0
    %270 = vmatpush1.xpose.msra.mxu0 0.0
    %271 = vmatprep.subr.mxu0 0.0
    %272 = vmatpush1.xpose.msra.mxu0 0.0
    %273 = vmatprep.subr.mxu0 0.0
    %274 = vmatpush1.xpose.msra.mxu0 0.0
    %275 = vmatprep.subr.mxu0 0.0
    %276 = vmatpush1.xpose.msra.mxu0 0.0
    %277 = vmatprep.subr.mxu0 0.0
    %278 = vmatpush1.xpose.msra.mxu0 0.0
    %279 = vmatprep.subr.mxu0 0.0
    %280 = vmatpush1.xpose.msra.mxu0 0.0
    %281 = vmatprep.subr.mxu0 0.0
    %282 = vmatpush1.xpose.msra.mxu0 0.0
    %283 = vmatprep.subr.mxu0 0.0
    %284 = vmatpush1.xpose.msra.mxu0 0.0
    %285 = vmatprep.subr.mxu0 0.0
    %286 = vmatpush1.xpose.msra.mxu0 0.0
    %287 = vmatprep.subr.mxu0 0.0
    %288 = vmatpush1.xpose.msra.mxu0 0.0
    %289 = vmatprep.subr.mxu0 0.0
    %290 = vmatpush1.xpose.msra.mxu0 0.0
    %291 = vmatprep.subr.mxu0 0.0
    %292 = vmatpush1.xpose.msra.mxu0 0.0
    %293 = vmatprep.subr.mxu0 0.0
    %294 = vmatpush1.xpose.msra.mxu0 0.0
    %295 = vmatprep.subr.mxu0 0.0
    %296 = vmatpush1.xpose.msra.mxu0 0.0
    %297 = vmatprep.subr.mxu0 0.0
    %298 = vmatpush1.xpose.msra.mxu0 0.0
    %299 = vmatprep.subr.mxu0 0.0
    %300 = vmatpush1.xpose.msra.mxu0 0.0
    %301 = vmatprep.subr.mxu0 0.0
    %302 = vmatpush1.xpose.msra.mxu0 0.0
    %303 = vmatprep.subr.mxu0 0.0
    %304 = vmatpush1.xpose.msra.mxu0 0.0
    %305 = vmatprep.subr.mxu0 0.0
    %306 = vmatpush1.xpose.msra.mxu0 0.0
    %307 = vmatprep.subr.mxu0 0.0
    %308 = vmatpush1.xpose.msra.mxu0 0.0
    %309 = vmatprep.mubr.f32.mxu0 0.0
    %310 = vmatmul.mubr.f32.gmra.mrb[0].mxu0 %v241
    %v311 = vpop.f32.mrb[0].mxu0
    %v312 = vadd.f32 0.0, %v311
    %v313 = vpop.f32.mrb[0].mxu0
    %314 = vdwg.mxu0
    %v315 = vsel %vm163, %v235, -inf
    %316 = vmax.xlane.f32.xlu0 %v315
    %v317 = vpop.xlane.xlu0 %316
    %v318 = vsel %vm163, %v312, -inf
    %319 = vmax.xlane.f32.xlu0 %v318
    %v320 = vpop.xlane.xlu0 %319
    %v321 = vsub.f32 %v235, %v317
    %v322 = vsub.f32 %v312, %v320
    %v323 = vmul.f32 %v321, 1.442695
    %v324 = vpow.pop %v323
    %v325 = vmul.f32 %v322, 1.442695
    %v326 = vpow.pop %v325
    %v327 = vsel %vm163, %v324, 0.0
    %328 = vadd.xlane.f32.xlu0 %v327
    %v329 = vpop.xlane.xlu0 %328
    %v330 = vsel %vm163, %v326, 0.0
    %331 = vadd.xlane.f32.xlu0 %v330
    %v332 = vpop.xlane.xlu0 %331
    %v333 = vrcp.pop %v329
    %v334 = vrcp.pop %v332
    %v335 = vmul.f32 %v324, %v333
    %v336 = vmul.f32 %v326, %v334
    %337 = vst.msk [vmem:[#allocation9] sm:$0xff] %vm163, %v335
    %338 = vst.msk [vmem:[#allocation9 + $0x20] sm:$0xff] %vm163, %v336
    %339 = vrot.lane.b32.xlu0 %v152, 64
    %v340 = vpop.permute.xlu0 %339
    %v343 = vsel %vm163, %v335, 0
    %345 = vmatprep.subr.mxu0 0.0
    %346 = vmatpush1.msra.mxu0 %v340
    %347 = vmatprep.subr.mxu0 0.0
    %348 = vmatpush1.msra.mxu0 0.0
    %349 = vmatprep.subr.mxu0 0.0
    %350 = vmatpush1.msra.mxu0 0.0
    %351 = vmatprep.subr.mxu0 0.0
    %352 = vmatpush1.msra.mxu0 0.0
    %353 = vmatprep.subr.mxu0 0.0
    %354 = vmatpush1.msra.mxu0 0.0
    %355 = vmatprep.subr.mxu0 0.0
    %356 = vmatpush1.msra.mxu0 0.0
    %357 = vmatprep.subr.mxu0 0.0
    %358 = vmatpush1.msra.mxu0 0.0
    %359 = vmatprep.subr.mxu0 0.0
    %360 = vmatpush1.msra.mxu0 0.0
    %361 = vmatprep.subr.mxu0 0.0
    %362 = vmatpush1.msra.mxu0 0.0
    %363 = vmatprep.subr.mxu0 0.0
    %364 = vmatpush1.msra.mxu0 0.0
    %365 = vmatprep.subr.mxu0 0.0
    %366 = vmatpush1.msra.mxu0 0.0
    %367 = vmatprep.subr.mxu0 0.0
    %368 = vmatpush1.msra.mxu0 0.0
    %369 = vmatprep.subr.mxu0 0.0
    %370 = vmatpush1.msra.mxu0 0.0
    %371 = vmatprep.subr.mxu0 0.0
    %372 = vmatpush1.msra.mxu0 0.0
    %373 = vmatprep.subr.mxu0 0.0
    %374 = vmatpush1.msra.mxu0 0.0
    %375 = vmatprep.subr.mxu0 0.0
    %376 = vmatpush1.msra.mxu0 0.0
    %377 = vmatprep.subr.mxu0 0.0
    %378 = vmatpush1.msra.mxu0 0.0
    %379 = vmatprep.subr.mxu0 0.0
    %380 = vmatpush1.msra.mxu0 0.0
    %381 = vmatprep.subr.mxu0 0.0
    %382 = vmatpush1.msra.mxu0 0.0
    %383 = vmatprep.subr.mxu0 0.0
    %384 = vmatpush1.msra.mxu0 0.0
    %385 = vmatprep.subr.mxu0 0.0
    %386 = vmatpush1.msra.mxu0 0.0
    %387 = vmatprep.subr.mxu0 0.0
    %388 = vmatpush1.msra.mxu0 0.0
    %389 = vmatprep.subr.mxu0 0.0
    %390 = vmatpush1.msra.mxu0 0.0
    %391 = vmatprep.subr.mxu0 0.0
    %392 = vmatpush1.msra.mxu0 0.0
    %393 = vmatprep.subr.mxu0 0.0
    %394 = vmatpush1.msra.mxu0 0.0
    %395 = vmatprep.subr.mxu0 0.0
    %396 = vmatpush1.msra.mxu0 0.0
    %397 = vmatprep.subr.mxu0 0.0
    %398 = vmatpush1.msra.mxu0 0.0
    %399 = vmatprep.subr.mxu0 0.0
    %400 = vmatpush1.msra.mxu0 0.0
    %401 = vmatprep.subr.mxu0 0.0
    %402 = vmatpush1.msra.mxu0 0.0
    %403 = vmatprep.subr.mxu0 0.0
    %404 = vmatpush1.msra.mxu0 0.0
    %405 = vmatprep.subr.mxu0 0.0
    %406 = vmatpush1.msra.mxu0 0.0
    %407 = vmatprep.subr.mxu0 0.0
    %408 = vmatpush1.msra.mxu0 0.0
    %409 = vmatprep.mubr.f32.mxu0 0.0
    %410 = vmatmul.mubr.f32.gmra.mrb[0].mxu0 %v343
    %v411 = vpop.f32.mrb[0].mxu0
    %v412 = vadd.f32 0.0, %v411
    %v413 = vpop.f32.mrb[0].mxu0
    %414 = vdwg.mxu0
    %415 = vrot.lane.b32.xlu0 %v157, 64
    %v416 = vpop.permute.xlu0 %415
    %v419 = vsel %vm163, %v336, 0
    %421 = vmatprep.subr.mxu0 0.0
    %422 = vmatpush1.msra.mxu0 %v416
    %423 = vmatprep.subr.mxu0 0.0
    %424 = vmatpush1.msra.mxu0 0.0
    %425 = vmatprep.subr.mxu0 0.0
    %426 = vmatpush1.msra.mxu0 0.0
    %427 = vmatprep.subr.mxu0 0.0
    %428 = vmatpush1.msra.mxu0 0.0
    %429 = vmatprep.subr.mxu0 0.0
    %430 = vmatpush1.msra.mxu0 0.0
    %431 = vmatprep.subr.mxu0 0.0
    %432 = vmatpush1.msra.mxu0 0.0
    %433 = vmatprep.subr.mxu0 0.0
    %434 = vmatpush1.msra.mxu0 0.0
    %435 = vmatprep.subr.mxu0 0.0
    %436 = vmatpush1.msra.mxu0 0.0
    %437 = vmatprep.subr.mxu0 0.0
    %438 = vmatpush1.msra.mxu0 0.0
    %439 = vmatprep.subr.mxu0 0.0
    %440 = vmatpush1.msra.mxu0 0.0
    %441 = vmatprep.subr.mxu0 0.0
    %442 = vmatpush1.msra.mxu0 0.0
    %443 = vmatprep.subr.mxu0 0.0
    %444 = vmatpush1.msra.mxu0 0.0
    %445 = vmatprep.subr.mxu0 0.0
    %446 = vmatpush1.msra.mxu0 0.0
    %447 = vmatprep.subr.mxu0 0.0
    %448 = vmatpush1.msra.mxu0 0.0
    %449 = vmatprep.subr.mxu0 0.0
    %450 = vmatpush1.msra.mxu0 0.0
    %451 = vmatprep.subr.mxu0 0.0
    %452 = vmatpush1.msra.mxu0 0.0
    %453 = vmatprep.subr.mxu0 0.0
    %454 = vmatpush1.msra.mxu0 0.0
    %455 = vmatprep.subr.mxu0 0.0
    %456 = vmatpush1.msra.mxu0 0.0
    %457 = vmatprep.subr.mxu0 0.0
    %458 = vmatpush1.msra.mxu0 0.0
    %459 = vmatprep.subr.mxu0 0.0
    %460 = vmatpush1.msra.mxu0 0.0
    %461 = vmatprep.subr.mxu0 0.0
    %462 = vmatpush1.msra.mxu0 0.0
    %463 = vmatprep.subr.mxu0 0.0
    %464 = vmatpush1.msra.mxu0 0.0
    %465 = vmatprep.subr.mxu0 0.0
    %466 = vmatpush1.msra.mxu0 0.0
    %467 = vmatprep.subr.mxu0 0.0
    %468 = vmatpush1.msra.mxu0 0.0
    %469 = vmatprep.subr.mxu0 0.0
    %470 = vmatpush1.msra.mxu0 0.0
    %471 = vmatprep.subr.mxu0 0.0
    %472 = vmatpush1.msra.mxu0 0.0
    %473 = vmatprep.subr.mxu0 0.0
    %474 = vmatpush1.msra.mxu0 0.0
    %475 = vmatprep.subr.mxu0 0.0
    %476 = vmatpush1.msra.mxu0 0.0
    %477 = vmatprep.subr.mxu0 0.0
    %478 = vmatpush1.msra.mxu0 0.0
    %479 = vmatprep.subr.mxu0 0.0
    %480 = vmatpush1.msra.mxu0 0.0
    %481 = vmatprep.subr.mxu0 0.0
    %482 = vmatpush1.msra.mxu0 0.0
    %483 = vmatprep.subr.mxu0 0.0
    %484 = vmatpush1.msra.mxu0 0.0
    %485 = vmatprep.mubr.f32.mxu0 0.0
    %486 = vmatmul.mubr.f32.gmra.mrb[0].mxu0 %v419
    %v487 = vpop.f32.mrb[0].mxu0
    %v488 = vadd.f32 0.0, %v487
    %v489 = vpop.f32.mrb[0].mxu0
    %490 = vdwg.mxu0
    %491 = vrot.lane.b32.xlu0 %v152, 120
    %v492 = vpop.permute.xlu0 %491
    %493 = vrot.lane.b32.xlu0 %v152, 88
    %v494 = vpop.permute.xlu0 %493
    %v495 = vsel %vm163, %v492, 0
    %v497 = vsel %vm163, %v494, 0
    %499 = vmatprep.subr.mxu0 0.0
    %500 = vmatpush1.xpose.msra.mxu0 %v497
    %501 = vmatprep.subr.mxu0 0.0
    %502 = vmatpush1.xpose.msra.mxu0 0.0
    %503 = vmatprep.subr.mxu0 0.0
    %504 = vmatpush1.xpose.msra.mxu0 0.0
    %505 = vmatprep.subr.mxu0 0.0
    %506 = vmatpush1.xpose.msra.mxu0 0.0
    %507 = vmatprep.subr.mxu0 0.0
    %508 = vmatpush1.xpose.msra.mxu0 0.0
    %509 = vmatprep.subr.mxu0 0.0
    %510 = vmatpush1.xpose.msra.mxu0 0.0
    %511 = vmatprep.subr.mxu0 0.0
    %512 = vmatpush1.xpose.msra.mxu0 0.0
    %513 = vmatprep.subr.mxu0 0.0
    %514 = vmatpush1.xpose.msra.mxu0 0.0
    %515 = vmatprep.subr.mxu0 0.0
    %516 = vmatpush1.xpose.msra.mxu0 0.0
    %517 = vmatprep.subr.mxu0 0.0
    %518 = vmatpush1.xpose.msra.mxu0 0.0
    %519 = vmatprep.subr.mxu0 0.0
    %520 = vmatpush1.xpose.msra.mxu0 0.0
    %521 = vmatprep.subr.mxu0 0.0
    %522 = vmatpush1.xpose.msra.mxu0 0.0
    %523 = vmatprep.subr.mxu0 0.0
    %524 = vmatpush1.xpose.msra.mxu0 0.0
    %525 = vmatprep.subr.mxu0 0.0
    %526 = vmatpush1.xpose.msra.mxu0 0.0
    %527 = vmatprep.subr.mxu0 0.0
    %528 = vmatpush1.xpose.msra.mxu0 0.0
    %529 = vmatprep.subr.mxu0 0.0
    %530 = vmatpush1.xpose.msra.mxu0 0.0
    %531 = vmatprep.subr.mxu0 0.0
    %532 = vmatpush1.xpose.msra.mxu0 0.0
    %533 = vmatprep.subr.mxu0 0.0
    %534 = vmatpush1.xpose.msra.mxu0 0.0
    %535 = vmatprep.subr.mxu0 0.0
    %536 = vmatpush1.xpose.msra.mxu0 0.0
    %537 = vmatprep.subr.mxu0 0.0
    %538 = vmatpush1.xpose.msra.mxu0 0.0
    %539 = vmatprep.subr.mxu0 0.0
    %540 = vmatpush1.xpose.msra.mxu0 0.0
    %541 = vmatprep.subr.mxu0 0.0
    %542 = vmatpush1.xpose.msra.mxu0 0.0
    %543 = vmatprep.subr.mxu0 0.0
    %544 = vmatpush1.xpose.msra.mxu0 0.0
    %545 = vmatprep.subr.mxu0 0.0
    %546 = vmatpush1.xpose.msra.mxu0 0.0
    %547 = vmatprep.subr.mxu0 0.0
    %548 = vmatpush1.xpose.msra.mxu0 0.0
    %549 = vmatprep.subr.mxu0 0.0
    %550 = vmatpush1.xpose.msra.mxu0 0.0
    %551 = vmatprep.subr.mxu0 0.0
    %552 = vmatpush1.xpose.msra.mxu0 0.0
    %553 = vmatprep.subr.mxu0 0.0
    %554 = vmatpush1.xpose.msra.mxu0 0.0
    %555 = vmatprep.subr.mxu0 0.0
    %556 = vmatpush1.xpose.msra.mxu0 0.0
    %557 = vmatprep.subr.mxu0 0.0
    %558 = vmatpush1.xpose.msra.mxu0 0.0
    %559 = vmatprep.subr.mxu0 0.0
    %560 = vmatpush1.xpose.msra.mxu0 0.0
    %561 = vmatprep.subr.mxu0 0.0
    %562 = vmatpush1.xpose.msra.mxu0 0.0
    %563 = vmatprep.mubr.f32.mxu0 0.0
    %564 = vmatmul.mubr.f32.gmra.mrb[0].mxu0 %v495
    %v565 = vpop.f32.mrb[0].mxu0
    %v566 = vadd.f32 0.0, %v565
    %v567 = vpop.f32.mrb[0].mxu0
    %568 = vdwg.mxu0
    %569 = vrot.lane.b32.xlu0 %v157, 120
    %v570 = vpop.permute.xlu0 %569
    %571 = vrot.lane.b32.xlu0 %v157, 88
    %v572 = vpop.permute.xlu0 %571
    %v573 = vsel %vm163, %v570, 0
    %v575 = vsel %vm163, %v572, 0
    %577 = vmatprep.subr.mxu0 0.0
    %578 = vmatpush1.xpose.msra.mxu0 %v575
    %579 = vmatprep.subr.mxu0 0.0
    %580 = vmatpush1.xpose.msra.mxu0 0.0
    %581 = vmatprep.subr.mxu0 0.0
    %582 = vmatpush1.xpose.msra.mxu0 0.0
    %583 = vmatprep.subr.mxu0 0.0
    %584 = vmatpush1.xpose.msra.mxu0 0.0
    %585 = vmatprep.subr.mxu0 0.0
    %586 = vmatpush1.xpose.msra.mxu0 0.0
    %587 = vmatprep.subr.mxu0 0.0
    %588 = vmatpush1.xpose.msra.mxu0 0.0
    %589 = vmatprep.subr.mxu0 0.0
    %590 = vmatpush1.xpose.msra.mxu0 0.0
    %591 = vmatprep.subr.mxu0 0.0
    %592 = vmatpush1.xpose.msra.mxu0 0.0
    %593 = vmatprep.subr.mxu0 0.0
    %594 = vmatpush1.xpose.msra.mxu0 0.0
    %595 = vmatprep.subr.mxu0 0.0
    %596 = vmatpush1.xpose.msra.mxu0 0.0
    %597 = vmatprep.subr.mxu0 0.0
    %598 = vmatpush1.xpose.msra.mxu0 0.0
    %599 = vmatprep.subr.mxu0 0.0
    %600 = vmatpush1.xpose.msra.mxu0 0.0
    %601 = vmatprep.subr.mxu0 0.0
    %602 = vmatpush1.xpose.msra.mxu0 0.0
    %603 = vmatprep.subr.mxu0 0.0
    %604 = vmatpush1.xpose.msra.mxu0 0.0
    %605 = vmatprep.subr.mxu0 0.0
    %606 = vmatpush1.xpose.msra.mxu0 0.0
    %607 = vmatprep.subr.mxu0 0.0
    %608 = vmatpush1.xpose.msra.mxu0 0.0
    %609 = vmatprep.subr.mxu0 0.0
    %610 = vmatpush1.xpose.msra.mxu0 0.0
    %611 = vmatprep.subr.mxu0 0.0
    %612 = vmatpush1.xpose.msra.mxu0 0.0
    %613 = vmatprep.subr.mxu0 0.0
    %614 = vmatpush1.xpose.msra.mxu0 0.0
    %615 = vmatprep.subr.mxu0 0.0
    %616 = vmatpush1.xpose.msra.mxu0 0.0
    %617 = vmatprep.subr.mxu0 0.0
    %618 = vmatpush1.xpose.msra.mxu0 0.0
    %619 = vmatprep.subr.mxu0 0.0
    %620 = vmatpush1.xpose.msra.mxu0 0.0
    %621 = vmatprep.subr.mxu0 0.0
    %622 = vmatpush1.xpose.msra.mxu0 0.0
    %623 = vmatprep.subr.mxu0 0.0
    %624 = vmatpush1.xpose.msra.mxu0 0.0
    %625 = vmatprep.subr.mxu0 0.0
    %626 = vmatpush1.xpose.msra.mxu0 0.0
    %627 = vmatprep.subr.mxu0 0.0
    %628 = vmatpush1.xpose.msra.mxu0 0.0
    %629 = vmatprep.subr.mxu0 0.0
    %630 = vmatpush1.xpose.msra.mxu0 0.0
    %631 = vmatprep.subr.mxu0 0.0
    %632 = vmatpush1.xpose.msra.mxu0 0.0
    %633 = vmatprep.subr.mxu0 0.0
    %634 = vmatpush1.xpose.msra.mxu0 0.0
    %635 = vmatprep.subr.mxu0 0.0
    %636 = vmatpush1.xpose.msra.mxu0 0.0
    %637 = vmatprep.subr.mxu0 0.0
    %638 = vmatpush1.xpose.msra.mxu0 0.0
    %639 = vmatprep.subr.mxu0 0.0
    %640 = vmatpush1.xpose.msra.mxu0 0.0
    %641 = vmatprep.mubr.f32.mxu0 0.0
    %642 = vmatmul.mubr.f32.gmra.mrb[0].mxu0 %v573
    %v643 = vpop.f32.mrb[0].mxu0
    %v644 = vadd.f32 0.0, %v643
    %v645 = vpop.f32.mrb[0].mxu0
    %646 = vdwg.mxu0
    %v647 = vsel %vm163, %v566, -inf
    %648 = vmax.xlane.f32.xlu0 %v647
    %v649 = vpop.xlane.xlu0 %648
    %v650 = vsel %vm163, %v644, -inf
    %651 = vmax.xlane.f32.xlu0 %v650
    %v652 = vpop.xlane.xlu0 %651
    %v653 = vsub.f32 %v566, %v649
    %v654 = vsub.f32 %v644, %v652
    %v655 = vmul.f32 %v653, 1.442695
    %v656 = vpow.pop %v655
    %v657 = vmul.f32 %v654, 1.442695
    %v658 = vpow.pop %v657
    %v659 = vsel %vm163, %v656, 0.0
    %660 = vadd.xlane.f32.xlu0 %v659
    %v661 = vpop.xlane.xlu0 %660
    %v662 = vsel %vm163, %v658, 0.0
    %663 = vadd.xlane.f32.xlu0 %v662
    %v664 = vpop.xlane.xlu0 %663
    %v665 = vrcp.pop %v661
    %v666 = vrcp.pop %v664
    %v667 = vmul.f32 %v656, %v665
    %v668 = vmul.f32 %v658, %v666
    %s669 = scalar_lea.vmem [#allocation9], 8
    %670 = vst.msk [vmem:[%s669] sm:$0xff] %vm163, %v667
    %671 = vst.msk [vmem:[%s669 + $0x20] sm:$0xff] %vm163, %v668
    %672 = vrot.lane.b32.xlu0 %v152, 56
    %v673 = vpop.permute.xlu0 %672
    %v676 = vsel %vm163, %v667, 0
    %678 = vmatprep.subr.mxu0 0.0
    %679 = vmatpush1.msra.mxu0 %v673
    %680 = vmatprep.subr.mxu0 0.0
    %681 = vmatpush1.msra.mxu0 0.0
    %682 = vmatprep.subr.mxu0 0.0
    %683 = vmatpush1.msra.mxu0 0.0
    %684 = vmatprep.subr.mxu0 0.0
    %685 = vmatpush1.msra.mxu0 0.0
    %686 = vmatprep.subr.mxu0 0.0
    %687 = vmatpush1.msra.mxu0 0.0
    %688 = vmatprep.subr.mxu0 0.0
    %689 = vmatpush1.msra.mxu0 0.0
    %690 = vmatprep.subr.mxu0 0.0
    %691 = vmatpush1.msra.mxu0 0.0
    %692 = vmatprep.subr.mxu0 0.0
    %693 = vmatpush1.msra.mxu0 0.0
    %694 = vmatprep.subr.mxu0 0.0
    %695 = vmatpush1.msra.mxu0 0.0
    %696 = vmatprep.subr.mxu0 0.0
    %697 = vmatpush1.msra.mxu0 0.0
    %698 = vmatprep.subr.mxu0 0.0
    %699 = vmatpush1.msra.mxu0 0.0
    %700 = vmatprep.subr.mxu0 0.0
    %701 = vmatpush1.msra.mxu0 0.0
    %702 = vmatprep.subr.mxu0 0.0
    %703 = vmatpush1.msra.mxu0 0.0
    %704 = vmatprep.subr.mxu0 0.0
    %705 = vmatpush1.msra.mxu0 0.0
    %706 = vmatprep.subr.mxu0 0.0
    %707 = vmatpush1.msra.mxu0 0.0
    %708 = vmatprep.subr.mxu0 0.0
    %709 = vmatpush1.msra.mxu0 0.0
    %710 = vmatprep.subr.mxu0 0.0
    %711 = vmatpush1.msra.mxu0 0.0
    %712 = vmatprep.subr.mxu0 0.0
    %713 = vmatpush1.msra.mxu0 0.0
    %714 = vmatprep.subr.mxu0 0.0
    %715 = vmatpush1.msra.mxu0 0.0
    %716 = vmatprep.subr.mxu0 0.0
    %717 = vmatpush1.msra.mxu0 0.0
    %718 = vmatprep.subr.mxu0 0.0
    %719 = vmatpush1.msra.mxu0 0.0
    %720 = vmatprep.subr.mxu0 0.0
    %721 = vmatpush1.msra.mxu0 0.0
    %722 = vmatprep.subr.mxu0 0.0
    %723 = vmatpush1.msra.mxu0 0.0
    %724 = vmatprep.subr.mxu0 0.0
    %725 = vmatpush1.msra.mxu0 0.0
    %726 = vmatprep.subr.mxu0 0.0
    %727 = vmatpush1.msra.mxu0 0.0
    %728 = vmatprep.subr.mxu0 0.0
    %729 = vmatpush1.msra.mxu0 0.0
    %730 = vmatprep.subr.mxu0 0.0
    %731 = vmatpush1.msra.mxu0 0.0
    %732 = vmatprep.subr.mxu0 0.0
    %733 = vmatpush1.msra.mxu0 0.0
    %734 = vmatprep.subr.mxu0 0.0
    %735 = vmatpush1.msra.mxu0 0.0
    %736 = vmatprep.subr.mxu0 0.0
    %737 = vmatpush1.msra.mxu0 0.0
    %738 = vmatprep.subr.mxu0 0.0
    %739 = vmatpush1.msra.mxu0 0.0
    %740 = vmatprep.subr.mxu0 0.0
    %741 = vmatpush1.msra.mxu0 0.0
    %742 = vmatprep.mubr.f32.mxu0 0.0
    %743 = vmatmul.mubr.f32.gmra.mrb[0].mxu0 %v676
    %v744 = vpop.f32.mrb[0].mxu0
    %v745 = vadd.f32 0.0, %v744
    %v746 = vpop.f32.mrb[0].mxu0
    %747 = vdwg.mxu0
    %748 = vrot.lane.b32.xlu0 %v157, 56
    %v749 = vpop.permute.xlu0 %748
    %v752 = vsel %vm163, %v668, 0
    %754 = vmatprep.subr.mxu0 0.0
    %755 = vmatpush1.msra.mxu0 %v749
    %756 = vmatprep.subr.mxu0 0.0
    %757 = vmatpush1.msra.mxu0 0.0
    %758 = vmatprep.subr.mxu0 0.0
    %759 = vmatpush1.msra.mxu0 0.0
    %760 = vmatprep.subr.mxu0 0.0
    %761 = vmatpush1.msra.mxu0 0.0
    %762 = vmatprep.subr.mxu0 0.0
    %763 = vmatpush1.msra.mxu0 0.0
    %764 = vmatprep.subr.mxu0 0.0
    %765 = vmatpush1.msra.mxu0 0.0
    %766 = vmatprep.subr.mxu0 0.0
    %767 = vmatpush1.msra.mxu0 0.0
    %768 = vmatprep.subr.mxu0 0.0
    %769 = vmatpush1.msra.mxu0 0.0
    %770 = vmatprep.subr.mxu0 0.0
    %771 = vmatpush1.msra.mxu0 0.0
    %772 = vmatprep.subr.mxu0 0.0
    %773 = vmatpush1.msra.mxu0 0.0
    %774 = vmatprep.subr.mxu0 0.0
    %775 = vmatpush1.msra.mxu0 0.0
    %776 = vmatprep.subr.mxu0 0.0
    %777 = vmatpush1.msra.mxu0 0.0
    %778 = vmatprep.subr.mxu0 0.0
    %779 = vmatpush1.msra.mxu0 0.0
    %780 = vmatprep.subr.mxu0 0.0
    %781 = vmatpush1.msra.mxu0 0.0
    %782 = vmatprep.subr.mxu0 0.0
    %783 = vmatpush1.msra.mxu0 0.0
    %784 = vmatprep.subr.mxu0 0.0
    %785 = vmatpush1.msra.mxu0 0.0
    %786 = vmatprep.subr.mxu0 0.0
    %787 = vmatpush1.msra.mxu0 0.0
    %788 = vmatprep.subr.mxu0 0.0
    %789 = vmatpush1.msra.mxu0 0.0
    %790 = vmatprep.subr.mxu0 0.0
    %791 = vmatpush1.msra.mxu0 0.0
    %792 = vmatprep.subr.mxu0 0.0
    %793 = vmatpush1.msra.mxu0 0.0
    %794 = vmatprep.subr.mxu0 0.0
    %795 = vmatpush1.msra.mxu0 0.0
    %796 = vmatprep.subr.mxu0 0.0
    %797 = vmatpush1.msra.mxu0 0.0
    %798 = vmatprep.subr.mxu0 0.0
    %799 = vmatpush1.msra.mxu0 0.0
    %800 = vmatprep.subr.mxu0 0.0
    %801 = vmatpush1.msra.mxu0 0.0
    %802 = vmatprep.subr.mxu0 0.0
    %803 = vmatpush1.msra.mxu0 0.0
    %804 = vmatprep.subr.mxu0 0.0
    %805 = vmatpush1.msra.mxu0 0.0
    %806 = vmatprep.subr.mxu0 0.0
    %807 = vmatpush1.msra.mxu0 0.0
    %808 = vmatprep.subr.mxu0 0.0
    %809 = vmatpush1.msra.mxu0 0.0
    %810 = vmatprep.subr.mxu0 0.0
    %811 = vmatpush1.msra.mxu0 0.0
    %812 = vmatprep.subr.mxu0 0.0
    %813 = vmatpush1.msra.mxu0 0.0
    %814 = vmatprep.subr.mxu0 0.0
    %815 = vmatpush1.msra.mxu0 0.0
    %816 = vmatprep.subr.mxu0 0.0
    %817 = vmatpush1.msra.mxu0 0.0
    %818 = vmatprep.mubr.f32.mxu0 0.0
    %819 = vmatmul.mubr.f32.gmra.mrb[0].mxu0 %v752
    %v820 = vpop.f32.mrb[0].mxu0
    %v821 = vadd.f32 0.0, %v820
    %v822 = vpop.f32.mrb[0].mxu0
    %823 = vdwg.mxu0
    %824 = vrot.lane.b32.xlu0 %v152, 112
    %v825 = vpop.permute.xlu0 %824
    %826 = vrot.lane.b32.xlu0 %v152, 80
    %v827 = vpop.permute.xlu0 %826
    %v828 = vsel %vm163, %v825, 0
    %v830 = vsel %vm163, %v827, 0
    %832 = vmatprep.subr.mxu0 0.0
    %833 = vmatpush1.xpose.msra.mxu0 %v830
    %834 = vmatprep.subr.mxu0 0.0
    %835 = vmatpush1.xpose.msra.mxu0 0.0
    %836 = vmatprep.subr.mxu0 0.0
    %837 = vmatpush1.xpose.msra.mxu0 0.0
    %838 = vmatprep.subr.mxu0 0.0
    %839 = vmatpush1.xpose.msra.mxu0 0.0
    %840 = vmatprep.subr.mxu0 0.0
    %841 = vmatpush1.xpose.msra.mxu0 0.0
    %842 = vmatprep.subr.mxu0 0.0
    %843 = vmatpush1.xpose.msra.mxu0 0.0
    %844 = vmatprep.subr.mxu0 0.0
    %845 = vmatpush1.xpose.msra.mxu0 0.0
    %846 = vmatprep.subr.mxu0 0.0
    %847 = vmatpush1.xpose.msra.mxu0 0.0
    %848 = vmatprep.subr.mxu0 0.0
    %849 = vmatpush1.xpose.msra.mxu0 0.0
    %850 = vmatprep.subr.mxu0 0.0
    %851 = vmatpush1.xpose.msra.mxu0 0.0
    %852 = vmatprep.subr.mxu0 0.0
    %853 = vmatpush1.xpose.msra.mxu0 0.0
    %854 = vmatprep.subr.mxu0 0.0
    %855 = vmatpush1.xpose.msra.mxu0 0.0
    %856 = vmatprep.subr.mxu0 0.0
    %857 = vmatpush1.xpose.msra.mxu0 0.0
    %858 = vmatprep.subr.mxu0 0.0
    %859 = vmatpush1.xpose.msra.mxu0 0.0
    %860 = vmatprep.subr.mxu0 0.0
    %861 = vmatpush1.xpose.msra.mxu0 0.0
    %862 = vmatprep.subr.mxu0 0.0
    %863 = vmatpush1.xpose.msra.mxu0 0.0
    %864 = vmatprep.subr.mxu0 0.0
    %865 = vmatpush1.xpose.msra.mxu0 0.0
    %866 = vmatprep.subr.mxu0 0.0
    %867 = vmatpush1.xpose.msra.mxu0 0.0
    %868 = vmatprep.subr.mxu0 0.0
    %869 = vmatpush1.xpose.msra.mxu0 0.0
    %870 = vmatprep.subr.mxu0 0.0
    %871 = vmatpush1.xpose.msra.mxu0 0.0
    %872 = vmatprep.subr.mxu0 0.0
    %873 = vmatpush1.xpose.msra.mxu0 0.0
    %874 = vmatprep.subr.mxu0 0.0
    %875 = vmatpush1.xpose.msra.mxu0 0.0
    %876 = vmatprep.subr.mxu0 0.0
    %877 = vmatpush1.xpose.msra.mxu0 0.0
    %878 = vmatprep.subr.mxu0 0.0
    %879 = vmatpush1.xpose.msra.mxu0 0.0
    %880 = vmatprep.subr.mxu0 0.0
    %881 = vmatpush1.xpose.msra.mxu0 0.0
    %882 = vmatprep.subr.mxu0 0.0
    %883 = vmatpush1.xpose.msra.mxu0 0.0
    %884 = vmatprep.subr.mxu0 0.0
    %885 = vmatpush1.xpose.msra.mxu0 0.0
    %886 = vmatprep.subr.mxu0 0.0
    %887 = vmatpush1.xpose.msra.mxu0 0.0
    %888 = vmatprep.subr.mxu0 0.0
    %889 = vmatpush1.xpose.msra.mxu0 0.0
    %890 = vmatprep.subr.mxu0 0.0
    %891 = vmatpush1.xpose.msra.mxu0 0.0
    %892 = vmatprep.subr.mxu0 0.0
    %893 = vmatpush1.xpose.msra.mxu0 0.0
    %894 = vmatprep.subr.mxu0 0.0
    %895 = vmatpush1.xpose.msra.mxu0 0.0
    %896 = vmatprep.mubr.f32.mxu0 0.0
    %897 = vmatmul.mubr.f32.gmra.mrb[0].mxu0 %v828
    %v898 = vpop.f32.mrb[0].mxu0
    %v899 = vadd.f32 0.0, %v898
    %v900 = vpop.f32.mrb[0].mxu0
    %901 = vdwg.mxu0
    %902 = vrot.lane.b32.xlu0 %v157, 112
    %v903 = vpop.permute.xlu0 %902
    %904 = vrot.lane.b32.xlu0 %v157, 80
    %v905 = vpop.permute.xlu0 %904
    %v906 = vsel %vm163, %v903, 0
    %v908 = vsel %vm163, %v905, 0
    %910 = vmatprep.subr.mxu0 0.0
    %911 = vmatpush1.xpose.msra.mxu0 %v908
    %912 = vmatprep.subr.mxu0 0.0
    %913 = vmatpush1.xpose.msra.mxu0 0.0
    %914 = vmatprep.subr.mxu0 0.0
    %915 = vmatpush1.xpose.msra.mxu0 0.0
    %916 = vmatprep.subr.mxu0 0.0
    %917 = vmatpush1.xpose.msra.mxu0 0.0
    %918 = vmatprep.subr.mxu0 0.0
    %919 = vmatpush1.xpose.msra.mxu0 0.0
    %920 = vmatprep.subr.mxu0 0.0
    %921 = vmatpush1.xpose.msra.mxu0 0.0
    %922 = vmatprep.subr.mxu0 0.0
    %923 = vmatpush1.xpose.msra.mxu0 0.0
    %924 = vmatprep.subr.mxu0 0.0
    %925 = vmatpush1.xpose.msra.mxu0 0.0
    %926 = vmatprep.subr.mxu0 0.0
    %927 = vmatpush1.xpose.msra.mxu0 0.0
    %928 = vmatprep.subr.mxu0 0.0
    %929 = vmatpush1.xpose.msra.mxu0 0.0
    %930 = vmatprep.subr.mxu0 0.0
    %931 = vmatpush1.xpose.msra.mxu0 0.0
    %932 = vmatprep.subr.mxu0 0.0
    %933 = vmatpush1.xpose.msra.mxu0 0.0
    %934 = vmatprep.subr.mxu0 0.0
    %935 = vmatpush1.xpose.msra.mxu0 0.0
    %936 = vmatprep.subr.mxu0 0.0
    %937 = vmatpush1.xpose.msra.mxu0 0.0
    %938 = vmatprep.subr.mxu0 0.0
    %939 = vmatpush1.xpose.msra.mxu0 0.0
    %940 = vmatprep.subr.mxu0 0.0
    %941 = vmatpush1.xpose.msra.mxu0 0.0
    %942 = vmatprep.subr.mxu0 0.0
    %943 = vmatpush1.xpose.msra.mxu0 0.0
    %944 = vmatprep.subr.mxu0 0.0
    %945 = vmatpush1.xpose.msra.mxu0 0.0
    %946 = vmatprep.subr.mxu0 0.0
    %947 = vmatpush1.xpose.msra.mxu0 0.0
    %948 = vmatprep.subr.mxu0 0.0
    %949 = vmatpush1.xpose.msra.mxu0 0.0
    %950 = vmatprep.subr.mxu0 0.0
    %951 = vmatpush1.xpose.msra.mxu0 0.0
    %952 = vmatprep.subr.mxu0 0.0
    %953 = vmatpush1.xpose.msra.mxu0 0.0
    %954 = vmatprep.subr.mxu0 0.0
    %955 = vmatpush1.xpose.msra.mxu0 0.0
    %956 = vmatprep.subr.mxu0 0.0
    %957 = vmatpush1.xpose.msra.mxu0 0.0
    %958 = vmatprep.subr.mxu0 0.0
    %959 = vmatpush1.xpose.msra.mxu0 0.0
    %960 = vmatprep.subr.mxu0 0.0
    %961 = vmatpush1.xpose.msra.mxu0 0.0
    %962 = vmatprep.subr.mxu0 0.0
    %963 = vmatpush1.xpose.msra.mxu0 0.0
    %964 = vmatprep.subr.mxu0 0.0
    %965 = vmatpush1.xpose.msra.mxu0 0.0
    %966 = vmatprep.subr.mxu0 0.0
    %967 = vmatpush1.xpose.msra.mxu0 0.0
    %968 = vmatprep.subr.mxu0 0.0
    %969 = vmatpush1.xpose.msra.mxu0 0.0
    %970 = vmatprep.subr.mxu0 0.0
    %971 = vmatpush1.xpose.msra.mxu0 0.0
    %972 = vmatprep.subr.mxu0 0.0
    %973 = vmatpush1.xpose.msra.mxu0 0.0
    %974 = vmatprep.mubr.f32.mxu0 0.0
    %975 = vmatmul.mubr.f32.gmra.mrb[0].mxu0 %v906
    %v976 = vpop.f32.mrb[0].mxu0
    %v977 = vadd.f32 0.0, %v976
    %v978 = vpop.f32.mrb[0].mxu0
    %979 = vdwg.mxu0
    %v980 = vsel %vm163, %v899, -inf
    %981 = vmax.xlane.f32.xlu0 %v980
    %v982 = vpop.xlane.xlu0 %981
    %v983 = vsel %vm163, %v977, -inf
    %984 = vmax.xlane.f32.xlu0 %v983
    %v985 = vpop.xlane.xlu0 %984
    %v986 = vsub.f32 %v899, %v982
    %v987 = vsub.f32 %v977, %v985
    %v988 = vmul.f32 %v986, 1.442695
    %v989 = vpow.pop %v988
    %v990 = vmul.f32 %v987, 1.442695
    %v991 = vpow.pop %v990
    %v992 = vsel %vm163, %v989, 0.0
    %993 = vadd.xlane.f32.xlu0 %v992
    %v994 = vpop.xlane.xlu0 %993
    %v995 = vsel %vm163, %v991, 0.0
    %996 = vadd.xlane.f32.xlu0 %v995
    %v997 = vpop.xlane.xlu0 %996
    %v998 = vrcp.pop %v994
    %v999 = vrcp.pop %v997
    %v1000 = vmul.f32 %v989, %v998
    %v1001 = vmul.f32 %v991, %v999
    %s1002 = scalar_lea.vmem [#allocation9], 16
    %1003 = vst.msk [vmem:[%s1002] sm:$0xff] %vm163, %v1000
    %1004 = vst.msk [vmem:[%s1002 + $0x20] sm:$0xff] %vm163, %v1001
    %1005 = vrot.lane.b32.xlu0 %v152, 48
    %v1006 = vpop.permute.xlu0 %1005
    %v1009 = vsel %vm163, %v1000, 0
    %1011 = vmatprep.subr.mxu0 0.0
    %1012 = vmatpush1.msra.mxu0 %v1006
    %1013 = vmatprep.subr.mxu0 0.0
    %1014 = vmatpush1.msra.mxu0 0.0
    %1015 = vmatprep.subr.mxu0 0.0
    %1016 = vmatpush1.msra.mxu0 0.0
    %1017 = vmatprep.subr.mxu0 0.0
    %1018 = vmatpush1.msra.mxu0 0.0
    %1019 = vmatprep.subr.mxu0 0.0
    %1020 = vmatpush1.msra.mxu0 0.0
    %1021 = vmatprep.subr.mxu0 0.0
    %1022 = vmatpush1.msra.mxu0 0.0
    %1023 = vmatprep.subr.mxu0 0.0
    %1024 = vmatpush1.msra.mxu0 0.0
    %1025 = vmatprep.subr.mxu0 0.0
    %1026 = vmatpush1.msra.mxu0 0.0
    %1027 = vmatprep.subr.mxu0 0.0
    %1028 = vmatpush1.msra.mxu0 0.0
    %1029 = vmatprep.subr.mxu0 0.0
    %1030 = vmatpush1.msra.mxu0 0.0
    %1031 = vmatprep.subr.mxu0 0.0
    %1032 = vmatpush1.msra.mxu0 0.0
    %1033 = vmatprep.subr.mxu0 0.0
    %1034 = vmatpush1.msra.mxu0 0.0
    %1035 = vmatprep.subr.mxu0 0.0
    %1036 = vmatpush1.msra.mxu0 0.0
    %1037 = vmatprep.subr.mxu0 0.0
    %1038 = vmatpush1.msra.mxu0 0.0
    %1039 = vmatprep.subr.mxu0 0.0
    %1040 = vmatpush1.msra.mxu0 0.0
    %1041 = vmatprep.subr.mxu0 0.0
    %1042 = vmatpush1.msra.mxu0 0.0
    %1043 = vmatprep.subr.mxu0 0.0
    %1044 = vmatpush1.msra.mxu0 0.0
    %1045 = vmatprep.subr.mxu0 0.0
    %1046 = vmatpush1.msra.mxu0 0.0
    %1047 = vmatprep.subr.mxu0 0.0
    %1048 = vmatpush1.msra.mxu0 0.0
    %1049 = vmatprep.subr.mxu0 0.0
    %1050 = vmatpush1.msra.mxu0 0.0
    %1051 = vmatprep.subr.mxu0 0.0
    %1052 = vmatpush1.msra.mxu0 0.0
    %1053 = vmatprep.subr.mxu0 0.0
    %1054 = vmatpush1.msra.mxu0 0.0
    %1055 = vmatprep.subr.mxu0 0.0
    %1056 = vmatpush1.msra.mxu0 0.0
    %1057 = vmatprep.subr.mxu0 0.0
    %1058 = vmatpush1.msra.mxu0 0.0
    %1059 = vmatprep.subr.mxu0 0.0
    %1060 = vmatpush1.msra.mxu0 0.0
    %1061 = vmatprep.subr.mxu0 0.0
    %1062 = vmatpush1.msra.mxu0 0.0
    %1063 = vmatprep.subr.mxu0 0.0
    %1064 = vmatpush1.msra.mxu0 0.0
    %1065 = vmatprep.subr.mxu0 0.0
    %1066 = vmatpush1.msra.mxu0 0.0
    %1067 = vmatprep.subr.mxu0 0.0
    %1068 = vmatpush1.msra.mxu0 0.0
    %1069 = vmatprep.subr.mxu0 0.0
    %1070 = vmatpush1.msra.mxu0 0.0
    %1071 = vmatprep.subr.mxu0 0.0
    %1072 = vmatpush1.msra.mxu0 0.0
    %1073 = vmatprep.subr.mxu0 0.0
    %1074 = vmatpush1.msra.mxu0 0.0
    %1075 = vmatprep.mubr.f32.mxu0 0.0
    %1076 = vmatmul.mubr.f32.gmra.mrb[0].mxu0 %v1009
    %v1077 = vpop.f32.mrb[0].mxu0
    %v1078 = vadd.f32 0.0, %v1077
    %v1079 = vpop.f32.mrb[0].mxu0
    %1080 = vdwg.mxu0
    %1081 = vrot.lane.b32.xlu0 %v157, 48
    %v1082 = vpop.permute.xlu0 %1081
    %v1085 = vsel %vm163, %v1001, 0
    %1087 = vmatprep.subr.mxu0 0.0
    %1088 = vmatpush1.msra.mxu0 %v1082
    %1089 = vmatprep.subr.mxu0 0.0
    %1090 = vmatpush1.msra.mxu0 0.0
    %1091 = vmatprep.subr.mxu0 0.0
    %1092 = vmatpush1.msra.mxu0 0.0
    %1093 = vmatprep.subr.mxu0 0.0
    %1094 = vmatpush1.msra.mxu0 0.0
    %1095 = vmatprep.subr.mxu0 0.0
    %1096 = vmatpush1.msra.mxu0 0.0
    %1097 = vmatprep.subr.mxu0 0.0
    %1098 = vmatpush1.msra.mxu0 0.0
    %1099 = vmatprep.subr.mxu0 0.0
    %1100 = vmatpush1.msra.mxu0 0.0
    %1101 = vmatprep.subr.mxu0 0.0
    %1102 = vmatpush1.msra.mxu0 0.0
    %1103 = vmatprep.subr.mxu0 0.0
    %1104 = vmatpush1.msra.mxu0 0.0
    %1105 = vmatprep.subr.mxu0 0.0
    %1106 = vmatpush1.msra.mxu0 0.0
    %1107 = vmatprep.subr.mxu0 0.0
    %1108 = vmatpush1.msra.mxu0 0.0
    %1109 = vmatprep.subr.mxu0 0.0
    %1110 = vmatpush1.msra.mxu0 0.0
    %1111 = vmatprep.subr.mxu0 0.0
    %1112 = vmatpush1.msra.mxu0 0.0
    %1113 = vmatprep.subr.mxu0 0.0
    %1114 = vmatpush1.msra.mxu0 0.0
    %1115 = vmatprep.subr.mxu0 0.0
    %1116 = vmatpush1.msra.mxu0 0.0
    %1117 = vmatprep.subr.mxu0 0.0
    %1118 = vmatpush1.msra.mxu0 0.0
    %1119 = vmatprep.subr.mxu0 0.0
    %1120 = vmatpush1.msra.mxu0 0.0
    %1121 = vmatprep.subr.mxu0 0.0
    %1122 = vmatpush1.msra.mxu0 0.0
    %1123 = vmatprep.subr.mxu0 0.0
    %1124 = vmatpush1.msra.mxu0 0.0
    %1125 = vmatprep.subr.mxu0 0.0
    %1126 = vmatpush1.msra.mxu0 0.0
    %1127 = vmatprep.subr.mxu0 0.0
    %1128 = vmatpush1.msra.mxu0 0.0
    %1129 = vmatprep.subr.mxu0 0.0
    %1130 = vmatpush1.msra.mxu0 0.0
    %1131 = vmatprep.subr.mxu0 0.0
    %1132 = vmatpush1.msra.mxu0 0.0
    %1133 = vmatprep.subr.mxu0 0.0
    %1134 = vmatpush1.msra.mxu0 0.0
    %1135 = vmatprep.subr.mxu0 0.0
    %1136 = vmatpush1.msra.mxu0 0.0
    %1137 = vmatprep.subr.mxu0 0.0
    %1138 = vmatpush1.msra.mxu0 0.0
    %1139 = vmatprep.subr.mxu0 0.0
    %1140 = vmatpush1.msra.mxu0 0.0
    %1141 = vmatprep.subr.mxu0 0.0
    %1142 = vmatpush1.msra.mxu0 0.0
    %1143 = vmatprep.subr.mxu0 0.0
    %1144 = vmatpush1.msra.mxu0 0.0
    %1145 = vmatprep.subr.mxu0 0.0
    %1146 = vmatpush1.msra.mxu0 0.0
    %1147 = vmatprep.subr.mxu0 0.0
    %1148 = vmatpush1.msra.mxu0 0.0
    %1149 = vmatprep.subr.mxu0 0.0
    %1150 = vmatpush1.msra.mxu0 0.0
    %1151 = vmatprep.mubr.f32.mxu0 0.0
    %1152 = vmatmul.mubr.f32.gmra.mrb[0].mxu0 %v1085
    %v1153 = vpop.f32.mrb[0].mxu0
    %v1154 = vadd.f32 0.0, %v1153
    %v1155 = vpop.f32.mrb[0].mxu0
    %1156 = vdwg.mxu0
    %1157 = vrot.lane.b32.xlu0 %v152, 104
    %v1158 = vpop.permute.xlu0 %1157
    %1159 = vrot.lane.b32.xlu0 %v152, 72
    %v1160 = vpop.permute.xlu0 %1159
    %v1161 = vsel %vm163, %v1158, 0
    %v1163 = vsel %vm163, %v1160, 0
    %1165 = vmatprep.subr.mxu0 0.0
    %1166 = vmatpush1.xpose.msra.mxu0 %v1163
    %1167 = vmatprep.subr.mxu0 0.0
    %1168 = vmatpush1.xpose.msra.mxu0 0.0
    %1169 = vmatprep.subr.mxu0 0.0
    %1170 = vmatpush1.xpose.msra.mxu0 0.0
    %1171 = vmatprep.subr.mxu0 0.0
    %1172 = vmatpush1.xpose.msra.mxu0 0.0
    %1173 = vmatprep.subr.mxu0 0.0
    %1174 = vmatpush1.xpose.msra.mxu0 0.0
    %1175 = vmatprep.subr.mxu0 0.0
    %1176 = vmatpush1.xpose.msra.mxu0 0.0
    %1177 = vmatprep.subr.mxu0 0.0
    %1178 = vmatpush1.xpose.msra.mxu0 0.0
    %1179 = vmatprep.subr.mxu0 0.0
    %1180 = vmatpush1.xpose.msra.mxu0 0.0
    %1181 = vmatprep.subr.mxu0 0.0
    %1182 = vmatpush1.xpose.msra.mxu0 0.0
    %1183 = vmatprep.subr.mxu0 0.0
    %1184 = vmatpush1.xpose.msra.mxu0 0.0
    %1185 = vmatprep.subr.mxu0 0.0
    %1186 = vmatpush1.xpose.msra.mxu0 0.0
    %1187 = vmatprep.subr.mxu0 0.0
    %1188 = vmatpush1.xpose.msra.mxu0 0.0
    %1189 = vmatprep.subr.mxu0 0.0
    %1190 = vmatpush1.xpose.msra.mxu0 0.0
    %1191 = vmatprep.subr.mxu0 0.0
    %1192 = vmatpush1.xpose.msra.mxu0 0.0
    %1193 = vmatprep.subr.mxu0 0.0
    %1194 = vmatpush1.xpose.msra.mxu0 0.0
    %1195 = vmatprep.subr.mxu0 0.0
    %1196 = vmatpush1.xpose.msra.mxu0 0.0
    %1197 = vmatprep.subr.mxu0 0.0
    %1198 = vmatpush1.xpose.msra.mxu0 0.0
    %1199 = vmatprep.subr.mxu0 0.0
    %1200 = vmatpush1.xpose.msra.mxu0 0.0
    %1201 = vmatprep.subr.mxu0 0.0
    %1202 = vmatpush1.xpose.msra.mxu0 0.0
    %1203 = vmatprep.subr.mxu0 0.0
    %1204 = vmatpush1.xpose.msra.mxu0 0.0
    %1205 = vmatprep.subr.mxu0 0.0
    %1206 = vmatpush1.xpose.msra.mxu0 0.0
    %1207 = vmatprep.subr.mxu0 0.0
    %1208 = vmatpush1.xpose.msra.mxu0 0.0
    %1209 = vmatprep.subr.mxu0 0.0
    %1210 = vmatpush1.xpose.msra.mxu0 0.0
    %1211 = vmatprep.subr.mxu0 0.0
    %1212 = vmatpush1.xpose.msra.mxu0 0.0
    %1213 = vmatprep.subr.mxu0 0.0
    %1214 = vmatpush1.xpose.msra.mxu0 0.0
    %1215 = vmatprep.subr.mxu0 0.0
    %1216 = vmatpush1.xpose.msra.mxu0 0.0
    %1217 = vmatprep.subr.mxu0 0.0
    %1218 = vmatpush1.xpose.msra.mxu0 0.0
    %1219 = vmatprep.subr.mxu0 0.0
    %1220 = vmatpush1.xpose.msra.mxu0 0.0
    %1221 = vmatprep.subr.mxu0 0.0
    %1222 = vmatpush1.xpose.msra.mxu0 0.0
    %1223 = vmatprep.subr.mxu0 0.0
    %1224 = vmatpush1.xpose.msra.mxu0 0.0
    %1225 = vmatprep.subr.mxu0 0.0
    %1226 = vmatpush1.xpose.msra.mxu0 0.0
    %1227 = vmatprep.subr.mxu0 0.0
    %1228 = vmatpush1.xpose.msra.mxu0 0.0
    %1229 = vmatprep.mubr.f32.mxu0 0.0
    %1230 = vmatmul.mubr.f32.gmra.mrb[0].mxu0 %v1161
    %v1231 = vpop.f32.mrb[0].mxu0
    %v1232 = vadd.f32 0.0, %v1231
    %v1233 = vpop.f32.mrb[0].mxu0
    %1234 = vdwg.mxu0
    %1235 = vrot.lane.b32.xlu0 %v157, 104
    %v1236 = vpop.permute.xlu0 %1235
    %1237 = vrot.lane.b32.xlu0 %v157, 72
    %v1238 = vpop.permute.xlu0 %1237
    %v1239 = vsel %vm163, %v1236, 0
    %v1241 = vsel %vm163, %v1238, 0
    %1243 = vmatprep.subr.mxu0 0.0
    %1244 = vmatpush1.xpose.msra.mxu0 %v1241
    %1245 = vmatprep.subr.mxu0 0.0
    %1246 = vmatpush1.xpose.msra.mxu0 0.0
    %1247 = vmatprep.subr.mxu0 0.0
    %1248 = vmatpush1.xpose.msra.mxu0 0.0
    %1249 = vmatprep.subr.mxu0 0.0
    %1250 = vmatpush1.xpose.msra.mxu0 0.0
    %1251 = vmatprep.subr.mxu0 0.0
    %1252 = vmatpush1.xpose.msra.mxu0 0.0
    %1253 = vmatprep.subr.mxu0 0.0
    %1254 = vmatpush1.xpose.msra.mxu0 0.0
    %1255 = vmatprep.subr.mxu0 0.0
    %1256 = vmatpush1.xpose.msra.mxu0 0.0
    %1257 = vmatprep.subr.mxu0 0.0
    %1258 = vmatpush1.xpose.msra.mxu0 0.0
    %1259 = vmatprep.subr.mxu0 0.0
    %1260 = vmatpush1.xpose.msra.mxu0 0.0
    %1261 = vmatprep.subr.mxu0 0.0
    %1262 = vmatpush1.xpose.msra.mxu0 0.0
    %1263 = vmatprep.subr.mxu0 0.0
    %1264 = vmatpush1.xpose.msra.mxu0 0.0
    %1265 = vmatprep.subr.mxu0 0.0
    %1266 = vmatpush1.xpose.msra.mxu0 0.0
    %1267 = vmatprep.subr.mxu0 0.0
    %1268 = vmatpush1.xpose.msra.mxu0 0.0
    %1269 = vmatprep.subr.mxu0 0.0
    %1270 = vmatpush1.xpose.msra.mxu0 0.0
    %1271 = vmatprep.subr.mxu0 0.0
    %1272 = vmatpush1.xpose.msra.mxu0 0.0
    %1273 = vmatprep.subr.mxu0 0.0
    %1274 = vmatpush1.xpose.msra.mxu0 0.0
    %1275 = vmatprep.subr.mxu0 0.0
    %1276 = vmatpush1.xpose.msra.mxu0 0.0
    %1277 = vmatprep.subr.mxu0 0.0
    %1278 = vmatpush1.xpose.msra.mxu0 0.0
    %1279 = vmatprep.subr.mxu0 0.0
    %1280 = vmatpush1.xpose.msra.mxu0 0.0
    %1281 = vmatprep.subr.mxu0 0.0
    %1282 = vmatpush1.xpose.msra.mxu0 0.0
    %1283 = vmatprep.subr.mxu0 0.0
    %1284 = vmatpush1.xpose.msra.mxu0 0.0
    %1285 = vmatprep.subr.mxu0 0.0
    %1286 = vmatpush1.xpose.msra.mxu0 0.0
    %1287 = vmatprep.subr.mxu0 0.0
    %1288 = vmatpush1.xpose.msra.mxu0 0.0
    %1289 = vmatprep.subr.mxu0 0.0
    %1290 = vmatpush1.xpose.msra.mxu0 0.0
    %1291 = vmatprep.subr.mxu0 0.0
    %1292 = vmatpush1.xpose.msra.mxu0 0.0
    %1293 = vmatprep.subr.mxu0 0.0
    %1294 = vmatpush1.xpose.msra.mxu0 0.0
    %1295 = vmatprep.subr.mxu0 0.0
    %1296 = vmatpush1.xpose.msra.mxu0 0.0
    %1297 = vmatprep.subr.mxu0 0.0
    %1298 = vmatpush1.xpose.msra.mxu0 0.0
    %1299 = vmatprep.subr.mxu0 0.0
    %1300 = vmatpush1.xpose.msra.mxu0 0.0
    %1301 = vmatprep.subr.mxu0 0.0
    %1302 = vmatpush1.xpose.msra.mxu0 0.0
    %1303 = vmatprep.subr.mxu0 0.0
    %1304 = vmatpush1.xpose.msra.mxu0 0.0
    %1305 = vmatprep.subr.mxu0 0.0
    %1306 = vmatpush1.xpose.msra.mxu0 0.0
    %1307 = vmatprep.mubr.f32.mxu0 0.0
    %1308 = vmatmul.mubr.f32.gmra.mrb[0].mxu0 %v1239
    %v1309 = vpop.f32.mrb[0].mxu0
    %v1310 = vadd.f32 0.0, %v1309
    %v1311 = vpop.f32.mrb[0].mxu0
    %1312 = vdwg.mxu0
    %v1313 = vsel %vm163, %v1232, -inf
    %1314 = vmax.xlane.f32.xlu0 %v1313
    %v1315 = vpop.xlane.xlu0 %1314
    %v1316 = vsel %vm163, %v1310, -inf
    %1317 = vmax.xlane.f32.xlu0 %v1316
    %v1318 = vpop.xlane.xlu0 %1317
    %v1319 = vsub.f32 %v1232, %v1315
    %v1320 = vsub.f32 %v1310, %v1318
    %v1321 = vmul.f32 %v1319, 1.442695
    %v1322 = vpow.pop %v1321
    %v1323 = vmul.f32 %v1320, 1.442695
    %v1324 = vpow.pop %v1323
    %v1325 = vsel %vm163, %v1322, 0.0
    %1326 = vadd.xlane.f32.xlu0 %v1325
    %v1327 = vpop.xlane.xlu0 %1326
    %v1328 = vsel %vm163, %v1324, 0.0
    %1329 = vadd.xlane.f32.xlu0 %v1328
    %v1330 = vpop.xlane.xlu0 %1329
    %v1331 = vrcp.pop %v1327
    %v1332 = vrcp.pop %v1330
    %v1333 = vmul.f32 %v1322, %v1331
    %v1334 = vmul.f32 %v1324, %v1332
    %s1335 = scalar_lea.vmem [#allocation9], 24
    %1336 = vst.msk [vmem:[%s1335] sm:$0xff] %vm163, %v1333
    %1337 = vst.msk [vmem:[%s1335 + $0x20] sm:$0xff] %vm163, %v1334
    %1338 = vrot.lane.b32.xlu0 %v152, 40
    %v1339 = vpop.permute.xlu0 %1338
    %v1342 = vsel %vm163, %v1333, 0
    %1344 = vmatprep.subr.mxu0 0.0
    %1345 = vmatpush1.msra.mxu0 %v1339
    %1346 = vmatprep.subr.mxu0 0.0
    %1347 = vmatpush1.msra.mxu0 0.0
    %1348 = vmatprep.subr.mxu0 0.0
    %1349 = vmatpush1.msra.mxu0 0.0
    %1350 = vmatprep.subr.mxu0 0.0
    %1351 = vmatpush1.msra.mxu0 0.0
    %1352 = vmatprep.subr.mxu0 0.0
    %1353 = vmatpush1.msra.mxu0 0.0
    %1354 = vmatprep.subr.mxu0 0.0
    %1355 = vmatpush1.msra.mxu0 0.0
    %1356 = vmatprep.subr.mxu0 0.0
    %1357 = vmatpush1.msra.mxu0 0.0
    %1358 = vmatprep.subr.mxu0 0.0
    %1359 = vmatpush1.msra.mxu0 0.0
    %1360 = vmatprep.subr.mxu0 0.0
    %1361 = vmatpush1.msra.mxu0 0.0
    %1362 = vmatprep.subr.mxu0 0.0
    %1363 = vmatpush1.msra.mxu0 0.0
    %1364 = vmatprep.subr.mxu0 0.0
    %1365 = vmatpush1.msra.mxu0 0.0
    %1366 = vmatprep.subr.mxu0 0.0
    %1367 = vmatpush1.msra.mxu0 0.0
    %1368 = vmatprep.subr.mxu0 0.0
    %1369 = vmatpush1.msra.mxu0 0.0
    %1370 = vmatprep.subr.mxu0 0.0
    %1371 = vmatpush1.msra.mxu0 0.0
    %1372 = vmatprep.subr.mxu0 0.0
    %1373 = vmatpush1.msra.mxu0 0.0
    %1374 = vmatprep.subr.mxu0 0.0
    %1375 = vmatpush1.msra.mxu0 0.0
    %1376 = vmatprep.subr.mxu0 0.0
    %1377 = vmatpush1.msra.mxu0 0.0
    %1378 = vmatprep.subr.mxu0 0.0
    %1379 = vmatpush1.msra.mxu0 0.0
    %1380 = vmatprep.subr.mxu0 0.0
    %1381 = vmatpush1.msra.mxu0 0.0
    %1382 = vmatprep.subr.mxu0 0.0
    %1383 = vmatpush1.msra.mxu0 0.0
    %1384 = vmatprep.subr.mxu0 0.0
    %1385 = vmatpush1.msra.mxu0 0.0
    %1386 = vmatprep.subr.mxu0 0.0
    %1387 = vmatpush1.msra.mxu0 0.0
    %1388 = vmatprep.subr.mxu0 0.0
    %1389 = vmatpush1.msra.mxu0 0.0
    %1390 = vmatprep.subr.mxu0 0.0
    %1391 = vmatpush1.msra.mxu0 0.0
    %1392 = vmatprep.subr.mxu0 0.0
    %1393 = vmatpush1.msra.mxu0 0.0
    %1394 = vmatprep.subr.mxu0 0.0
    %1395 = vmatpush1.msra.mxu0 0.0
    %1396 = vmatprep.subr.mxu0 0.0
    %1397 = vmatpush1.msra.mxu0 0.0
    %1398 = vmatprep.subr.mxu0 0.0
    %1399 = vmatpush1.msra.mxu0 0.0
    %1400 = vmatprep.subr.mxu0 0.0
    %1401 = vmatpush1.msra.mxu0 0.0
    %1402 = vmatprep.subr.mxu0 0.0
    %1403 = vmatpush1.msra.mxu0 0.0
    %1404 = vmatprep.subr.mxu0 0.0
    %1405 = vmatpush1.msra.mxu0 0.0
    %1406 = vmatprep.subr.mxu0 0.0
    %1407 = vmatpush1.msra.mxu0 0.0
    %1408 = vmatprep.mubr.f32.mxu0 0.0
    %1409 = vmatmul.mubr.f32.gmra.mrb[0].mxu0 %v1342
    %v1410 = vpop.f32.mrb[0].mxu0
    %v1411 = vadd.f32 0.0, %v1410
    %v1412 = vpop.f32.mrb[0].mxu0
    %1413 = vdwg.mxu0
    %1414 = vrot.lane.b32.xlu0 %v157, 40
    %v1415 = vpop.permute.xlu0 %1414
    %v1418 = vsel %vm163, %v1334, 0
    %1420 = vmatprep.subr.mxu0 0.0
    %1421 = vmatpush1.msra.mxu0 %v1415
    %1422 = vmatprep.subr.mxu0 0.0
    %1423 = vmatpush1.msra.mxu0 0.0
    %1424 = vmatprep.subr.mxu0 0.0
    %1425 = vmatpush1.msra.mxu0 0.0
    %1426 = vmatprep.subr.mxu0 0.0
    %1427 = vmatpush1.msra.mxu0 0.0
    %1428 = vmatprep.subr.mxu0 0.0
    %1429 = vmatpush1.msra.mxu0 0.0
    %1430 = vmatprep.subr.mxu0 0.0
    %1431 = vmatpush1.msra.mxu0 0.0
    %1432 = vmatprep.subr.mxu0 0.0
    %1433 = vmatpush1.msra.mxu0 0.0
    %1434 = vmatprep.subr.mxu0 0.0
    %1435 = vmatpush1.msra.mxu0 0.0
    %1436 = vmatprep.subr.mxu0 0.0
    %1437 = vmatpush1.msra.mxu0 0.0
    %1438 = vmatprep.subr.mxu0 0.0
    %1439 = vmatpush1.msra.mxu0 0.0
    %1440 = vmatprep.subr.mxu0 0.0
    %1441 = vmatpush1.msra.mxu0 0.0
    %1442 = vmatprep.subr.mxu0 0.0
    %1443 = vmatpush1.msra.mxu0 0.0
    %1444 = vmatprep.subr.mxu0 0.0
    %1445 = vmatpush1.msra.mxu0 0.0
    %1446 = vmatprep.subr.mxu0 0.0
    %1447 = vmatpush1.msra.mxu0 0.0
    %1448 = vmatprep.subr.mxu0 0.0
    %1449 = vmatpush1.msra.mxu0 0.0
    %1450 = vmatprep.subr.mxu0 0.0
    %1451 = vmatpush1.msra.mxu0 0.0
    %1452 = vmatprep.subr.mxu0 0.0
    %1453 = vmatpush1.msra.mxu0 0.0
    %1454 = vmatprep.subr.mxu0 0.0
    %1455 = vmatpush1.msra.mxu0 0.0
    %1456 = vmatprep.subr.mxu0 0.0
    %1457 = vmatpush1.msra.mxu0 0.0
    %1458 = vmatprep.subr.mxu0 0.0
    %1459 = vmatpush1.msra.mxu0 0.0
    %1460 = vmatprep.subr.mxu0 0.0
    %1461 = vmatpush1.msra.mxu0 0.0
    %1462 = vmatprep.subr.mxu0 0.0
    %1463 = vmatpush1.msra.mxu0 0.0
    %1464 = vmatprep.subr.mxu0 0.0
    %1465 = vmatpush1.msra.mxu0 0.0
    %1466 = vmatprep.subr.mxu0 0.0
    %1467 = vmatpush1.msra.mxu0 0.0
    %1468 = vmatprep.subr.mxu0 0.0
    %1469 = vmatpush1.msra.mxu0 0.0
    %1470 = vmatprep.subr.mxu0 0.0
    %1471 = vmatpush1.msra.mxu0 0.0
    %1472 = vmatprep.subr.mxu0 0.0
    %1473 = vmatpush1.msra.mxu0 0.0
    %1474 = vmatprep.subr.mxu0 0.0
    %1475 = vmatpush1.msra.mxu0 0.0
    %1476 = vmatprep.subr.mxu0 0.0
    %1477 = vmatpush1.msra.mxu0 0.0
    %1478 = vmatprep.subr.mxu0 0.0
    %1479 = vmatpush1.msra.mxu0 0.0
    %1480 = vmatprep.subr.mxu0 0.0
    %1481 = vmatpush1.msra.mxu0 0.0
    %1482 = vmatprep.subr.mxu0 0.0
    %1483 = vmatpush1.msra.mxu0 0.0
    %1484 = vmatprep.mubr.f32.mxu0 0.0
    %1485 = vmatmul.mubr.f32.gmra.mrb[0].mxu0 %v1418
    %v1486 = vpop.f32.mrb[0].mxu0
    %v1487 = vadd.f32 0.0, %v1486
    %v1488 = vpop.f32.mrb[0].mxu0
    %1489 = vdwg.mxu0
    %1492 = vrot.lane.b32.xlu0 %v745, 8
    %v1493 = vpop.permute.xlu0 %1492
    %1494 = vrot.lane.b32.xlu0 %v821, 8
    %v1495 = vpop.permute.xlu0 %1494
    %1500 = vrot.lane.b32.xlu0 %v1078, 16
    %v1501 = vpop.permute.xlu0 %1500
    %1502 = vrot.lane.b32.xlu0 %v1154, 16
    %v1503 = vpop.permute.xlu0 %1502
    %1508 = vrot.lane.b32.xlu0 %v1411, 24
    %v1509 = vpop.permute.xlu0 %1508
    %1510 = vrot.lane.b32.xlu0 %v1487, 24
    %v1511 = vpop.permute.xlu0 %1510
    %v1514 = vsel %vm163, %v412, %v1493
    %v1515 = vsel %vm163, %v488, %v1495
    %vm1516 = vcmask 130048
    %v1517 = vsel %vm1516, %v1514, %v1501
    %v1518 = vsel %vm1516, %v1515, %v1503
    %vm1519 = vcmask 195584
    %v1520 = vsel %vm1519, %v1517, %v1509
    %v1521 = vsel %vm1519, %v1518, %v1511
    %v1522 = vld [vmem:[#allocation7] sm:$0xff]
    %v1523 = vld [vmem:[#allocation7 + $0x8] sm:$0xff]
    %v1524 = vld [vmem:[#allocation7 + $0x10] sm:$0xff]
    %v1525 = vld [vmem:[#allocation7 + $0x18] sm:$0xff]
    %v1526 = vld [vmem:[%s4] sm:$0x1]
    %v1528 = vlaneseq
    %v1529 = vshrl.u32 %v1528, 7
    %v1530 = vsub.s32 0, %v1529
    %v1531 = vrot.slane %v1526, %v1530
    %v1534 = vsel %vm78, %v1520, 0
    %v1537 = vsel %vm78, %v1521, 0
    %1539 = vmatprep.subr.mxu0 0.0
    %1540 = vmatpush1.msra.mxu0 %v1522
    %1541 = vmatprep.subr.mxu0 0.0
    %1542 = vmatpush1.msra.mxu0 %v1523
    %1543 = vmatprep.subr.mxu0 0.0
    %1544 = vmatpush1.msra.mxu0 %v1524
    %1545 = vmatprep.subr.mxu0 0.0
    %1546 = vmatpush1.msra.mxu0 %v1525
    %1547 = vmatprep.subr.mxu0 0.0
    %1548 = vmatpush1.msra.mxu0 0.0
    %1549 = vmatprep.subr.mxu0 0.0
    %1550 = vmatpush1.msra.mxu0 0.0
    %1551 = vmatprep.subr.mxu0 0.0
    %1552 = vmatpush1.msra.mxu0 0.0
    %1553 = vmatprep.subr.mxu0 0.0
    %1554 = vmatpush1.msra.mxu0 0.0
    %1555 = vmatprep.subr.mxu0 0.0
    %1556 = vmatpush1.msra.mxu0 0.0
    %1557 = vmatprep.subr.mxu0 0.0
    %1558 = vmatpush1.msra.mxu0 0.0
    %1559 = vmatprep.subr.mxu0 0.0
    %1560 = vmatpush1.msra.mxu0 0.0
    %1561 = vmatprep.subr.mxu0 0.0
    %1562 = vmatpush1.msra.mxu0 0.0
    %1563 = vmatprep.subr.mxu0 0.0
    %1564 = vmatpush1.msra.mxu0 0.0
    %1565 = vmatprep.subr.mxu0 0.0
    %1566 = vmatpush1.msra.mxu0 0.0
    %1567 = vmatprep.subr.mxu0 0.0
    %1568 = vmatpush1.msra.mxu0 0.0
    %1569 = vmatprep.subr.mxu0 0.0
    %1570 = vmatpush1.msra.mxu0 0.0
    %1571 = vmatprep.subr.mxu0 0.0
    %1572 = vmatpush1.msra.mxu0 0.0
    %1573 = vmatprep.subr.mxu0 0.0
    %1574 = vmatpush1.msra.mxu0 0.0
    %1575 = vmatprep.subr.mxu0 0.0
    %1576 = vmatpush1.msra.mxu0 0.0
    %1577 = vmatprep.subr.mxu0 0.0
    %1578 = vmatpush1.msra.mxu0 0.0
    %1579 = vmatprep.subr.mxu0 0.0
    %1580 = vmatpush1.msra.mxu0 0.0
    %1581 = vmatprep.subr.mxu0 0.0
    %1582 = vmatpush1.msra.mxu0 0.0
    %1583 = vmatprep.subr.mxu0 0.0
    %1584 = vmatpush1.msra.mxu0 0.0
    %1585 = vmatprep.subr.mxu0 0.0
    %1586 = vmatpush1.msra.mxu0 0.0
    %1587 = vmatprep.subr.mxu0 0.0
    %1588 = vmatpush1.msra.mxu0 0.0
    %1589 = vmatprep.subr.mxu0 0.0
    %1590 = vmatpush1.msra.mxu0 0.0
    %1591 = vmatprep.subr.mxu0 0.0
    %1592 = vmatpush1.msra.mxu0 0.0
    %1593 = vmatprep.subr.mxu0 0.0
    %1594 = vmatpush1.msra.mxu0 0.0
    %1595 = vmatprep.subr.mxu0 0.0
    %1596 = vmatpush1.msra.mxu0 0.0
    %1597 = vmatprep.subr.mxu0 0.0
    %1598 = vmatpush1.msra.mxu0 0.0
    %1599 = vmatprep.subr.mxu0 0.0
    %1600 = vmatpush1.msra.mxu0 0.0
    %1601 = vmatprep.subr.mxu0 0.0
    %1602 = vmatpush1.msra.mxu0 0.0
    %1603 = vmatprep.mubr.f32.mxu0 0.0
    %1604 = vmatmul.mubr.f32.gmra.mrb[0].mxu0 %v1534
    %v1605 = vpop.f32.mrb[0].mxu0
    %v1606 = vadd.f32 %v1531, %v1605
    %v1607 = vpop.f32.mrb[0].mxu0
    %1608 = vmatprep.mubr.f32.mxu0 0.0
    %1609 = vmatmul.mubr.f32.gmra.mrb[0].mxu0 %v1537
    %v1610 = vpop.f32.mrb[0].mxu0
    %v1611 = vadd.f32 %v1531, %v1610
    %v1612 = vpop.f32.mrb[0].mxu0
    %1613 = vdwg.mxu0
    %1614 = vst.msk [vmem:[#allocation8] sm:$0xff] %vm78, %v1606
    %1615 = vst.msk [vmem:[#allocation8 + $0x8] sm:$0xff] %vm78, %v1611
    // Predicated region
    $region34: #{tpu_custom_call.1} parent=1 // pred_check
      _
    $region35: #{tpu_custom_call.1} parent=1 // pred_check_branch
      %1617 = sbr.rel (0) target = $region37
    $region36: #{tpu_custom_call.1} parent=1 // pred_region
      %s1619 = ssub.s32 256, 256
      %1620 = vsyncadd [#allocation4], %s1619
      %s1621 = sshll.u32 [#allocation8], 4
      %s1622 = int_to_ptr.vmem [resolvable:$true] %s1621
      %1627 = dma.vmem_to_hbm [thread:$0]  %s1622, 256, %s5, [#allocation4], 128, 128, 8
    $region37: #{tpu_custom_call.1} parent=1 // pred_fallthru
      _
    // Predicated region
    $region38: #{tpu_custom_call.1} parent=1 // pred_check
      _
    $region39: #{tpu_custom_call.1} parent=1 // pred_check_branch
      %1629 = sbr.rel (0) target = $region41
    $region40: #{tpu_custom_call.1} parent=1 // pred_region
      %s1631 = ssub.s32 1024, 1024
      %1632 = vsyncadd [#allocation10], %s1631
      %s1633 = sshll.u32 [#allocation9], 4
      %s1634 = int_to_ptr.vmem [resolvable:$true] %s1633
      %1639 = dma.vmem_to_hbm [thread:$0]  %s1634, 1024, %s6, [#allocation10], 128, 128, 8
    $region41: #{tpu_custom_call.1} parent=1 // pred_fallthru
      _
    // Predicated region
    $region42: #{tpu_custom_call.1} parent=1 // pred_check
      _
    $region43: #{tpu_custom_call.1} parent=1 // pred_check_branch
      %1641 = sbr.rel (0) target = $region45
    $region44: #{tpu_custom_call.1} parent=1 // pred_region
      %1642 = dma.done [#allocation4], 256
    $region45: #{tpu_custom_call.1} parent=1 // pred_fallthru
      _
    // Predicated region
    $region46: #{tpu_custom_call.1} parent=1 // pred_check
      _
    $region47: #{tpu_custom_call.1} parent=1 // pred_check_branch
      %1644 = sbr.rel (0) target = $region49
    $region48: #{tpu_custom_call.1} parent=1 // pred_region
      %1645 = dma.done [#allocation10], 1024
    $region49: #{tpu_custom_call.1} parent=1 // pred_fallthru
      _
    %1646 = vsyncpa [#allocation3], 1
    %1647 = vsyncpa [#allocation6], 1
    %1648 = vsyncpa [#allocation4], 1
    %1649 = vsyncpa [#allocation10], 1

</llo_original>
